<compile_context>
chip_gen: v7x
topology: tpu7x:2x2x1
jax: 0.10.0
libtpu: 0.0.40
codegen_flags: <defaults>
</compile_context>

<pallas_src>
import functools

import jax
import jax.numpy as jnp
from jax.experimental import pallas as pl
from jax.experimental.pallas import tpu as pltpu

_TM_CAP = 512  # fits VMEM on every generation (worst case K=4608 bf16)


def _default_vmem_limit():
    try:
        cap = int(pltpu.get_tpu_info().vmem_capacity_bytes)
    except Exception:
        cap = 0
    if cap >= 128 * 1024 * 1024:          # v5e / v6e: exploit the 128 MiB
        return 96 * 1024 * 1024
    return 48 * 1024 * 1024               # v7x (64 MiB physical) / fallback


_VMEM_LIMIT = _default_vmem_limit()


def _pick_tn(n):
    if n % 256 == 0:
        return 256
    if n % 128 == 0:
        return 128
    return n                               # full extent (e.g. Cout = 64)


# ----------------------------------------------------------------------------
# Pallas kernels
# ----------------------------------------------------------------------------
def _matmul_bias_kernel(x_ref, w_ref, b_ref, o_ref, *, relu):
    # bf16 x bf16 -> f32 on the MXU; "+ shift" / ReLU epilogue in f32.
    acc = jnp.dot(x_ref[...], w_ref[...], preferred_element_type=jnp.float32)
    y = acc + b_ref[...]
    if relu:
        y = jnp.maximum(y, 0.0)
    o_ref[...] = y.astype(o_ref.dtype)


def _matmul_bias_res_kernel(x_ref, w_ref, b_ref, r_ref, o_ref):
    # Last conv of a bottleneck: conv + BN-shift + residual add + ReLU, fused.
    acc = jnp.dot(x_ref[...], w_ref[...], preferred_element_type=jnp.float32)
    y = acc + b_ref[...] + r_ref[...].astype(jnp.float32)
    o_ref[...] = jnp.maximum(y, 0.0).astype(o_ref.dtype)


def _conv3x3_s1_kernel(x_ref, w_ref, b_ref, o_ref, *, relu):
    # Implicit GEMM, stride 1.
    #   x_ref: (1, H+2, W+2, Cin) halo-padded image (bf16)
    #   w_ref: (9, Cin, tn) folded weights (bf16);  b_ref: (1, tn) shift (f32)
    #   o_ref: (1, H, W, tn)
    _, hp, wp, cin = x_ref.shape
    ho, wo = hp - 2, wp - 2
    tn = o_ref.shape[-1]
    acc = jnp.zeros((ho * wo, tn), jnp.float32)
    for t in range(9):
        di, dj = divmod(t, 3)
        tap = x_ref[0, pl.ds(di, ho), pl.ds(dj, wo), :]
        tap = tap.reshape(ho * wo, cin)
        acc = acc + jnp.dot(tap, w_ref[t], preferred_element_type=jnp.float32)
    y = acc + b_ref[...]
    if relu:
        y = jnp.maximum(y, 0.0)
    o_ref[...] = y.reshape(1, ho, wo, tn).astype(o_ref.dtype)


def _maxpool3x3_kernel(x_ref, o_ref):
    # Dense (stride-1) 3x3 max over a -inf padded image; the stride-2
    # subsampling happens outside (cheap XLA slice).
    _, hp, wp, _ = x_ref.shape
    ho, wo = hp - 2, wp - 2
    r = x_ref[0, pl.ds(0, ho), pl.ds(0, wo), :]
    for t in range(1, 9):
        di, dj = divmod(t, 3)
        r = jnp.maximum(r, x_ref[0, pl.ds(di, ho), pl.ds(dj, wo), :])
    o_ref[...] = r[None]


def _avgpool_kernel(x_ref, o_ref, *, inv_hw):
    # x: (N, H*W, C) bf16 -> mean over the spatial axis in f32.
    o_ref[...] = jnp.sum(x_ref[...].astype(jnp.float32), axis=1) * inv_hw


# ----------------------------------------------------------------------------
# Pallas wrappers (called from inside block-level jits; shapes are static)
# ----------------------------------------------------------------------------
def _gemm(x_p, w, shift, residual=None, relu=True):
    """(M,K) bf16 @ (K,N) bf16 -> (M,N) bf16, + shift [+ residual], ReLU."""
    M, K = x_p.shape
    N = w.shape[1]
    tm = M if M <= _TM_CAP else _TM_CAP
    tn = _pick_tn(N)
    gi, gj = pl.cdiv(M, tm), pl.cdiv(N, tn)

    # Operand residency: keep the operand whose re-read would be more
    # expensive stationary on the outer grid axis.
    w_outer = (M * K) * (gj - 1) <= (K * N) * (gi - 1)
    if w_outer:                       # Cout outermost: weight tile resident
        grid = (gj, gi)
        xm = lambda j, i: (i, 0)
        wm = lambda j, i: (0, j)
        bm = lambda j, i: (0, j)
        om = lambda j, i: (i, j)
    else:                             # M outermost: x tile resident
        grid = (gi, gj)
        xm = lambda i, j: (i, 0)
        wm = lambda i, j: (0, j)
        bm = lambda i, j: (0, j)
        om = lambda i, j: (i, j)

    in_specs = [pl.BlockSpec((tm, K), xm),
                pl.BlockSpec((K, tn), wm),
                pl.BlockSpec((1, tn), bm)]
    args = [x_p, w, shift]
    if residual is None:
        kernel = functools.partial(_matmul_bias_kernel, relu=relu)
    else:
        kernel = _matmul_bias_res_kernel
        in_specs.append(pl.BlockSpec((tm, tn), om))
        args.append(residual)

    return pl.pallas_call(
        kernel,
        out_shape=jax.ShapeDtypeStruct((M, N), jnp.bfloat16),
        grid=grid,
        in_specs=in_specs,
        out_specs=pl.BlockSpec((tm, tn), om),
        compiler_params=pltpu.CompilerParams(
            dimension_semantics=("parallel", "parallel"),
            vmem_limit_bytes=_VMEM_LIMIT),
    )(*args)


def _conv3x3(x, p, stride=1, relu=True):
    """3x3 conv, pad=1.  Stride 1 -> implicit GEMM; stride 2 -> im2col."""
    N, H, W, Cin = x.shape
    Cout = p["w"].shape[-1]
    if stride == 1:
        xp = jnp.pad(x, ((0, 0), (1, 1), (1, 1), (0, 0)))
        tn = _pick_tn(Cout)
        return pl.pallas_call(
            functools.partial(_conv3x3_s1_kernel, relu=relu),
            out_shape=jax.ShapeDtypeStruct((N, H, W, Cout), jnp.bfloat16),
            grid=(N, Cout // tn),
            in_specs=[
                pl.BlockSpec((1, H + 2, W + 2, Cin), lambda n, j: (n, 0, 0, 0)),
                pl.BlockSpec((9, Cin, tn), lambda n, j: (0, 0, j)),
                pl.BlockSpec((1, tn), lambda n, j: (0, j)),
            ],
            out_specs=pl.BlockSpec((1, H, W, tn), lambda n, j: (n, 0, 0, j)),
            compiler_params=pltpu.CompilerParams(
                dimension_semantics=("parallel", "parallel"),
                vmem_limit_bytes=_VMEM_LIMIT),
        )(xp, p["w"], p["shift"])
    # TODO(synk): the 3 stride-2 3x3 convs still materialize im2col patches.
    patches, Ho, Wo = _im2col(x, 3, 3, stride, 1)
    out = _gemm(patches, p["w"].reshape(-1, Cout), p["shift"], relu=relu)
    return out.reshape(N, Ho, Wo, Cout)


def _conv1x1(x, p, stride=1, relu=True):
    if stride != 1:
        x = x[:, ::stride, ::stride, :]
    N, H, W, C = x.shape
    out = _gemm(x.reshape(N * H * W, C), p["w"], p["shift"], relu=relu)
    return out.reshape(N, H, W, -1)


def _maxpool_3x3_s2(x):
    N, H, W, C = x.shape
    xp = jnp.pad(x, ((0, 0), (1, 1), (1, 1), (0, 0)), constant_values=-jnp.inf)
    dense = pl.pallas_call(
        _maxpool3x3_kernel,
        out_shape=jax.ShapeDtypeStruct((N, H, W, C), x.dtype),
        grid=(N,),
        in_specs=[pl.BlockSpec((1, H + 2, W + 2, C), lambda n: (n, 0, 0, 0))],
        out_specs=pl.BlockSpec((1, H, W, C), lambda n: (n, 0, 0, 0)),
        compiler_params=pltpu.CompilerParams(
            dimension_semantics=("parallel",),
            vmem_limit_bytes=_VMEM_LIMIT),
    )(xp)
    return dense[:, ::2, ::2, :]          # stride-2 subsample (fused by XLA)


# ----------------------------------------------------------------------------
# Plain-JAX glue
# ----------------------------------------------------------------------------
def _im2col(x, kh, kw, stride, pad):
    """x: (N, H, W, C) bf16 -> patches (N*Ho*Wo, kh*kw*C) bf16."""
    N, H, W, C = x.shape
    Ho = (H + 2 * pad - kh) // stride + 1
    Wo = (W + 2 * pad - kw) // stride + 1
    xp = jnp.pad(x, ((0, 0), (pad, pad), (pad, pad), (0, 0)))
    taps = [xp[:, i:i + stride * Ho:stride, j:j + stride * Wo:stride, :]
            for i in range(kh) for j in range(kw)]
    patches = jnp.stack(taps, axis=3)                 # (N, Ho, Wo, kh*kw, C)
    return patches.reshape(N * Ho * Wo, kh * kw * C), Ho, Wo


@jax.jit
def _stem(x_nchw, p_conv1):
    # NCHW f32 -> NHWC bf16; conv1 (7x7 s2, K padded 147->256) + maxpool.
    x = jnp.transpose(x_nchw, (0, 2, 3, 1)).astype(jnp.bfloat16)
    N = x.shape[0]
    patches, Ho, Wo = _im2col(x, 7, 7, 2, 3)
    k_pad = p_conv1["w"].shape[0]
    if k_pad != patches.shape[1]:
        patches = jnp.pad(patches, ((0, 0), (0, k_pad - patches.shape[1])))
    x = _gemm(patches, p_conv1["w"], p_conv1["shift"], relu=True)
    x = x.reshape(N, Ho, Wo, -1)
    return _maxpool_3x3_s2(x)


@functools.partial(jax.jit, static_argnames=("stride",))
def _bottleneck(x, p, *, stride):
    out = _conv1x1(x, p["conv1"], 1, relu=True)
    out = _conv3x3(out, p["conv2"], stride, relu=True)
    if "downsample" in p:
        identity = _conv1x1(x, p["downsample"], stride, relu=False)
    else:
        identity = x
    N, Ho, Wo, mid = out.shape
    cout = p["conv3"]["w"].shape[-1]
    y = _gemm(out.reshape(N * Ho * Wo, mid),
              p["conv3"]["w"], p["conv3"]["shift"],
              residual=identity.reshape(N * Ho * Wo, cout))
    return y.reshape(N, Ho, Wo, cout)


@jax.jit
def _head(x):
    N, H, W, C = x.shape
    pooled = pl.pallas_call(
        functools.partial(_avgpool_kernel, inv_hw=1.0 / (H * W)),
        out_shape=jax.ShapeDtypeStruct((N, C), jnp.float32),
    )(x.reshape(N, H * W, C))
    return jnp.transpose(pooled.reshape(N, 1, 1, C), (0, 3, 1, 2))


_STAGES = (("layer1", 64, 3, 1), ("layer2", 128, 4, 2),
           ("layer3", 256, 23, 2), ("layer4", 512, 3, 2))


def resnet101_forward(x_nchw, params):
    x = _stem(x_nchw, params["conv1"])
    for name, _, _, stage_stride in _STAGES:
        for bi, bp in enumerate(params[name]):
            x = _bottleneck(x, bp, stride=stage_stride if bi == 0 else 1)
    return _head(x)                                   # (N, 2048, 1, 1) f32


# ----------------------------------------------------------------------------
# Deterministic synthetic parameters (resnet101 shapes, eval-mode BN folded
# fully into the weights + shift)
# ----------------------------------------------------------------------------
def _init_conv_bn(key, kh, kw, cin, cout, k_pad_to=None):
    k1, k2, k3 = jax.random.split(key, 3)
    fan_in = kh * kw * cin
    w = jax.random.normal(k1, (fan_in, cout), jnp.float32) * (2.0 / fan_in) ** 0.5
    gamma = 1.0 + 0.1 * jax.random.normal(k2, (cout,), jnp.float32)
    beta = 0.1 * jax.random.normal(k3, (cout,), jnp.float32)
    eps = 1e-5
    scale = gamma / jnp.sqrt(1.0 + eps)   # running_var = 1, running_mean = 0
    shift = beta                          # beta - running_mean * scale
    wf = w * scale[None, :]               # fold BN scale into the weights
    if k_pad_to is not None and k_pad_to > fan_in:
        wf = jnp.pad(wf, ((0, k_pad_to - fan_in), (0, 0)))
    if kh == 3 and kw == 3:
        wf = wf.reshape(9, cin, cout)      # (tap, Cin, Cout) for implicit GEMM
    return {"w": wf.astype(jnp.bfloat16),
            "shift": shift.reshape(1, cout).astype(jnp.float32)}


def make_resnet101_params(key):
    counter = [0]

    def nk():
        counter[0] += 1
        return jax.random.fold_in(key, counter[0])

    params = {"conv1": _init_conv_bn(nk(), 7, 7, 3, 64, k_pad_to=256)}
    in_c = 64
    for name, mid, nblocks, stride in _STAGES:
        blocks = []
        for b in range(nblocks):
            out_c = mid * 4
            s = stride if b == 0 else 1
            bp = {
                "conv1": _init_conv_bn(nk(), 1, 1, in_c, mid),
                "conv2": _init_conv_bn(nk(), 3, 3, mid, mid),
                "conv3": _init_conv_bn(nk(), 1, 1, mid, out_c),
            }
            if s != 1 or in_c != out_c:
                bp["downsample"] = _init_conv_bn(nk(), 1, 1, in_c, out_c)
            blocks.append(bp)
            in_c = out_c
        params[name] = blocks
    return params


# ----------------------------------------------------------------------------
if __name__ == "__main__":
    # Small but architecture-consistent input: RGB, 32x32 spatial
    # (32 -> 16 (conv1) -> 8 (maxpool) -> 8 -> 4 -> 2 -> 1, then avgpool).
    key = jax.random.PRNGKey(0)
    k_in, k_par = jax.random.split(key)
    x = jax.random.normal(k_in, (2, 3, 32, 32), jnp.float32)   # NCHW like PyTorch

    params = make_resnet101_params(k_par)

    out = resnet101_forward(x, params)
    out = jax.block_until_ready(out)

    assert out.shape == (2, 2048, 1, 1), out.shape
    assert out.dtype == jnp.float32
    assert bool(jnp.all(jnp.isfinite(out)))
    print("KERNEL_OK")
</pallas_src>

<mosaic_0001>
module attributes {stable_mosaic.version = 11 : i64} {
  func.func @_matmul_bias_kernel(%arg0: i32, %arg1: i32, %arg2: memref<512x256xbf16, #tpu.memory_space<vmem>>, %arg3: memref<256x64xbf16, #tpu.memory_space<vmem>>, %arg4: memref<1x64xf32, #tpu.memory_space<vmem>>, %arg5: memref<512x64xbf16, #tpu.memory_space<vmem>>) attributes {dimension_semantics = [#tpu.dimension_semantics<parallel>, #tpu.dimension_semantics<parallel>], iteration_bounds = array<i64: 1, 1>, scalar_prefetch = 0 : i64, scratch_operands = 0 : i64, tpu.core_type = #tpu.core_type<tc>, window_params = [{transform_indices = @transform_0, window_bounds = array<i64: 512, 256>}, {transform_indices = @transform_1, window_bounds = array<i64: 256, 64>}, {transform_indices = @transform_2, window_bounds = array<i64: 1, 64>}, {transform_indices = @transform_3, window_bounds = array<i64: 512, 64>}]} {
    %c0 = arith.constant 0 : index
    %c0_0 = arith.constant 0 : index
    %0 = vector.load %arg2[%c0, %c0_0] : memref<512x256xbf16, #tpu.memory_space<vmem>>, vector<512x256xbf16>
    %c0_1 = arith.constant 0 : index
    %c0_2 = arith.constant 0 : index
    %1 = vector.load %arg3[%c0_1, %c0_2] : memref<256x64xbf16, #tpu.memory_space<vmem>>, vector<256x64xbf16>
    %cst = arith.constant dense<0.000000e+00> : vector<512x64xf32>
    %2 = tpu.matmul %0, %1, %cst {dimension_numbers = #tpu.dot_dimension_numbers<[1], [0], [0], [1], [0, 0, 1, 1], [], []>} : vector<512x256xbf16>, vector<256x64xbf16>, vector<512x64xf32> -> vector<512x64xf32>
    %c0_3 = arith.constant 0 : index
    %c0_4 = arith.constant 0 : index
    %3 = vector.load %arg4[%c0_3, %c0_4] : memref<1x64xf32, #tpu.memory_space<vmem>>, vector<1x64xf32>
    %4 = vector.broadcast %3 : vector<1x64xf32> to vector<512x64xf32>
    %5 = arith.addf %2, %4 : vector<512x64xf32>
    %cst_5 = arith.constant 0.000000e+00 : f32
    %6 = vector.broadcast %cst_5 : f32 to vector<512x64xf32>
    %7 = arith.maximumf %5, %6 : vector<512x64xf32>
    %8 = arith.truncf %7 : vector<512x64xf32> to vector<512x64xbf16>
    %c0_6 = arith.constant 0 : index
    %c0_7 = arith.constant 0 : index
    %9 = vector.load %arg5[%c0_6, %c0_7] : memref<512x64xbf16, #tpu.memory_space<vmem>>, vector<512x64xbf16>
    tpu.vector_store %arg5[%c0_6, %c0_7], %8 {strides = array<i32>} : memref<512x64xbf16, #tpu.memory_space<vmem>>, vector<512x64xbf16>,
    return
  }
  func.func @transform_0(%arg0: i32, %arg1: i32) -> (i32, i32) {
    %c0_i32 = arith.constant 0 : i32
    %c0_i32_0 = arith.constant 0 : i32
    return %arg1, %c0_i32 : i32, i32
  }
  func.func @transform_1(%arg0: i32, %arg1: i32) -> (i32, i32) {
    %c0_i32 = arith.constant 0 : i32
    %c0_i32_0 = arith.constant 0 : i32
    return %c0_i32, %arg0 : i32, i32
  }
  func.func @transform_2(%arg0: i32, %arg1: i32) -> (i32, i32) {
    %c0_i32 = arith.constant 0 : i32
    %c0_i32_0 = arith.constant 0 : i32
    return %c0_i32, %arg0 : i32, i32
  }
  func.func @transform_3(%arg0: i32, %arg1: i32) -> (i32, i32) {
    %c0_i32 = arith.constant 0 : i32
    return %arg1, %arg0 : i32, i32
  }
}

module attributes {stable_mosaic.version = 11 : i64} {
  func.func @_maxpool3x3_kernel(%arg0: i32, %arg1: memref<1x18x18x64xbf16, #tpu.memory_space<vmem>>, %arg2: memref<1x16x16x64xbf16, #tpu.memory_space<vmem>>) attributes {dimension_semantics = [#tpu.dimension_semantics<parallel>], iteration_bounds = array<i64: 2>, scalar_prefetch = 0 : i64, scratch_operands = 0 : i64, tpu.core_type = #tpu.core_type<tc>, window_params = [{transform_indices = @transform_0, window_bounds = array<i64: 1, 18, 18, 64>}, {transform_indices = @transform_1, window_bounds = array<i64: 1, 16, 16, 64>}]} {
    %c0 = arith.constant 0 : index
    %c0_0 = arith.constant 0 : index
    %c0_1 = arith.constant 0 : index
    %c0_2 = arith.constant 0 : index
    %0 = vector.load %arg1[%c0, %c0_0, %c0_1, %c0_2] : memref<1x18x18x64xbf16, #tpu.memory_space<vmem>>, vector<1x16x16x64xbf16>
    %1 = vector.shape_cast %0 : vector<1x16x16x64xbf16> to vector<16x16x64xbf16>
    %c0_3 = arith.constant 0 : index
    %c0_4 = arith.constant 0 : index
    %c1 = arith.constant 1 : index
    %c0_5 = arith.constant 0 : index
    %2 = vector.load %arg1[%c0_3, %c0_4, %c1, %c0_5] : memref<1x18x18x64xbf16, #tpu.memory_space<vmem>>, vector<1x16x16x64xbf16>
    %3 = vector.shape_cast %2 : vector<1x16x16x64xbf16> to vector<16x16x64xbf16>
    %4 = arith.maximumf %1, %3 : vector<16x16x64xbf16>
    %c0_6 = arith.constant 0 : index
    %c0_7 = arith.constant 0 : index
    %c2 = arith.constant 2 : index
    %c0_8 = arith.constant 0 : index
    %5 = vector.load %arg1[%c0_6, %c0_7, %c2, %c0_8] : memref<1x18x18x64xbf16, #tpu.memory_space<vmem>>, vector<1x16x16x64xbf16>
    %6 = vector.shape_cast %5 : vector<1x16x16x64xbf16> to vector<16x16x64xbf16>
    %7 = arith.maximumf %4, %6 : vector<16x16x64xbf16>
    %c0_9 = arith.constant 0 : index
    %c1_10 = arith.constant 1 : index
    %c0_11 = arith.constant 0 : index
    %c0_12 = arith.constant 0 : index
    %8 = vector.load %arg1[%c0_9, %c1_10, %c0_11, %c0_12] : memref<1x18x18x64xbf16, #tpu.memory_space<vmem>>, vector<1x16x16x64xbf16>
    %9 = vector.shape_cast %8 : vector<1x16x16x64xbf16> to vector<16x16x64xbf16>
    %10 = arith.maximumf %7, %9 : vector<16x16x64xbf16>
    %c0_13 = arith.constant 0 : index
    %c1_14 = arith.constant 1 : index
    %c1_15 = arith.constant 1 : index
    %c0_16 = arith.constant 0 : index
    %11 = vector.load %arg1[%c0_13, %c1_14, %c1_15, %c0_16] : memref<1x18x18x64xbf16, #tpu.memory_space<vmem>>, vector<1x16x16x64xbf16>
    %12 = vector.shape_cast %11 : vector<1x16x16x64xbf16> to vector<16x16x64xbf16>
    %13 = arith.maximumf %10, %12 : vector<16x16x64xbf16>
    %c0_17 = arith.constant 0 : index
    %c1_18 = arith.constant 1 : index
    %c2_19 = arith.constant 2 : index
    %c0_20 = arith.constant 0 : index
    %14 = vector.load %arg1[%c0_17, %c1_18, %c2_19, %c0_20] : memref<1x18x18x64xbf16, #tpu.memory_space<vmem>>, vector<1x16x16x64xbf16>
    %15 = vector.shape_cast %14 : vector<1x16x16x64xbf16> to vector<16x16x64xbf16>
    %16 = arith.maximumf %13, %15 : vector<16x16x64xbf16>
    %c0_21 = arith.constant 0 : index
    %c2_22 = arith.constant 2 : index
    %c0_23 = arith.constant 0 : index
    %c0_24 = arith.constant 0 : index
    %17 = vector.load %arg1[%c0_21, %c2_22, %c0_23, %c0_24] : memref<1x18x18x64xbf16, #tpu.memory_space<vmem>>, vector<1x16x16x64xbf16>
    %18 = vector.shape_cast %17 : vector<1x16x16x64xbf16> to vector<16x16x64xbf16>
    %19 = arith.maximumf %16, %18 : vector<16x16x64xbf16>
    %c0_25 = arith.constant 0 : index
    %c2_26 = arith.constant 2 : index
    %c1_27 = arith.constant 1 : index
    %c0_28 = arith.constant 0 : index
    %20 = vector.load %arg1[%c0_25, %c2_26, %c1_27, %c0_28] : memref<1x18x18x64xbf16, #tpu.memory_space<vmem>>, vector<1x16x16x64xbf16>
    %21 = vector.shape_cast %20 : vector<1x16x16x64xbf16> to vector<16x16x64xbf16>
    %22 = arith.maximumf %19, %21 : vector<16x16x64xbf16>
    %c0_29 = arith.constant 0 : index
    %c2_30 = arith.constant 2 : index
    %c2_31 = arith.constant 2 : index
    %c0_32 = arith.constant 0 : index
    %23 = vector.load %arg1[%c0_29, %c2_30, %c2_31, %c0_32] : memref<1x18x18x64xbf16, #tpu.memory_space<vmem>>, vector<1x16x16x64xbf16>
    %24 = vector.shape_cast %23 : vector<1x16x16x64xbf16> to vector<16x16x64xbf16>
    %25 = arith.maximumf %22, %24 : vector<16x16x64xbf16>
    %26 = vector.shape_cast %25 : vector<16x16x64xbf16> to vector<1x16x16x64xbf16>
    %c0_33 = arith.constant 0 : index
    %c0_34 = arith.constant 0 : index
    %c0_35 = arith.constant 0 : index
    %c0_36 = arith.constant 0 : index
    %27 = vector.load %arg2[%c0_33, %c0_34, %c0_35, %c0_36] : memref<1x16x16x64xbf16, #tpu.memory_space<vmem>>, vector<1x16x16x64xbf16>
    tpu.vector_store %arg2[%c0_33, %c0_34, %c0_35, %c0_36], %26 {strides = array<i32>} : memref<1x16x16x64xbf16, #tpu.memory_space<vmem>>, vector<1x16x16x64xbf16>,
    return
  }
  func.func @transform_0(%arg0: i32) -> (i32, i32, i32, i32) {
    %c0_i32 = arith.constant 0 : i32
    %c0_i32_0 = arith.constant 0 : i32
    %c0_i32_1 = arith.constant 0 : i32
    %c0_i32_2 = arith.constant 0 : i32
    return %arg0, %c0_i32, %c0_i32_0, %c0_i32_1 : i32, i32, i32, i32
  }
  func.func @transform_1(%arg0: i32) -> (i32, i32, i32, i32) {
    %c0_i32 = arith.constant 0 : i32
    %c0_i32_0 = arith.constant 0 : i32
    %c0_i32_1 = arith.constant 0 : i32
    %c0_i32_2 = arith.constant 0 : i32
    return %arg0, %c0_i32, %c0_i32_0, %c0_i32_1 : i32, i32, i32, i32
  }
}

</mosaic_0001>

<llo_original>
// kernel: _stem.2
$region0: #{_stem.2}
  #allocation0 [shape = 'u32[]', space=smem, size = 0x4, offset = 0x4, fixed_abs, tag = 'smem constant byte address 0x4 - core index']
  #allocation1 [shape = 'u32[144,128]{1,0:T(1,128)}', space=vmem, size = 0x12000, scoped, tag = 'internal scratch']
  %s0 = inlined_call_operand.vmem [shape: bf16[512,256], index: 0, kind: input, shape index: {}]
  %s1 = inlined_call_operand.vmem [shape: bf16[256,64], index: 1, kind: input, shape index: {}]
  %s2 = inlined_call_operand.vmem [shape: f32[1,64], index: 2, kind: input, shape index: {}]
  %s3 = inlined_call_operand.vmem [shape: bf16[512,64], index: 3, kind: output, shape index: {}]
  %s4 = sld [smem:[#allocation0]]
  $region22: #{_stem.2} parent=0
    _
  %s6 = ssub.s32 1, %s4
  %s7 = scalar_select 0, %s6, %s4
  // Predicated region
  $region2: #{_stem.2} parent=0 // pred_check
    _
  $region3: #{_stem.2} parent=0 // pred_check_branch
    %9 = sbr.rel (0) target = $region5
  $region4: #{_stem.2} parent=0 // pred_region
    _
  $region5: #{_stem.2} parent=0 // pred_fallthru
    _
  // Predicated region
  $region6: #{_stem.2} parent=0 // pred_check
    _
  $region7: #{_stem.2} parent=0 // pred_check_branch
    %11 = sbr.rel (0) target = $region9
  $region8: #{_stem.2} parent=0 // pred_region
    _
  $region9: #{_stem.2} parent=0 // pred_fallthru
    _
  // Predicated region
  $region10: #{_stem.2} parent=0 // pred_check
    _
  $region11: #{_stem.2} parent=0 // pred_check_branch
    %13 = sbr.rel (0) target = $region13
  $region12: #{_stem.2} parent=0 // pred_region
    _
  $region13: #{_stem.2} parent=0 // pred_fallthru
    _
  %v15 = vld [vmem:[%s0] sm:$0xff]
  %v16 = vld [vmem:[%s0 + $0x8] sm:$0xff]
  %v17 = vld [vmem:[%s0 + $0x10] sm:$0xff]
  %v18 = vld [vmem:[%s0 + $0x18] sm:$0xff]
  %v19 = vld [vmem:[%s0 + $0x20] sm:$0xff]
  %v20 = vld [vmem:[%s0 + $0x28] sm:$0xff]
  %v21 = vld [vmem:[%s0 + $0x30] sm:$0xff]
  %v22 = vld [vmem:[%s0 + $0x38] sm:$0xff]
  %v23 = vld [vmem:[%s0 + $0x40] sm:$0xff]
  %v24 = vld [vmem:[%s0 + $0x48] sm:$0xff]
  %v25 = vld [vmem:[%s0 + $0x50] sm:$0xff]
  %v26 = vld [vmem:[%s0 + $0x58] sm:$0xff]
  %v27 = vld [vmem:[%s0 + $0x60] sm:$0xff]
  %v28 = vld [vmem:[%s0 + $0x68] sm:$0xff]
  %v29 = vld [vmem:[%s0 + $0x70] sm:$0xff]
  %v30 = vld [vmem:[%s0 + $0x78] sm:$0xff]
  %v31 = vld [vmem:[%s0 + $0x80] sm:$0xff]
  %v32 = vld [vmem:[%s0 + $0x88] sm:$0xff]
  %v33 = vld [vmem:[%s0 + $0x90] sm:$0xff]
  %v34 = vld [vmem:[%s0 + $0x98] sm:$0xff]
  %v35 = vld [vmem:[%s0 + $0xa0] sm:$0xff]
  %v36 = vld [vmem:[%s0 + $0xa8] sm:$0xff]
  %v37 = vld [vmem:[%s0 + $0xb0] sm:$0xff]
  %v38 = vld [vmem:[%s0 + $0xb8] sm:$0xff]
  %v39 = vld [vmem:[%s0 + $0xc0] sm:$0xff]
  %v40 = vld [vmem:[%s0 + $0xc8] sm:$0xff]
  %v41 = vld [vmem:[%s0 + $0xd0] sm:$0xff]
  %v42 = vld [vmem:[%s0 + $0xd8] sm:$0xff]
  %v43 = vld [vmem:[%s0 + $0xe0] sm:$0xff]
  %v44 = vld [vmem:[%s0 + $0xe8] sm:$0xff]
  %v45 = vld [vmem:[%s0 + $0xf0] sm:$0xff]
  %v46 = vld [vmem:[%s0 + $0xf8] sm:$0xff]
  %v47 = vld [vmem:[%s0 + $0x100] sm:$0xff]
  %v48 = vld [vmem:[%s0 + $0x108] sm:$0xff]
  %v49 = vld [vmem:[%s0 + $0x110] sm:$0xff]
  %v50 = vld [vmem:[%s0 + $0x118] sm:$0xff]
  %v51 = vld [vmem:[%s0 + $0x120] sm:$0xff]
  %v52 = vld [vmem:[%s0 + $0x128] sm:$0xff]
  %v53 = vld [vmem:[%s0 + $0x130] sm:$0xff]
  %v54 = vld [vmem:[%s0 + $0x138] sm:$0xff]
  %v55 = vld [vmem:[%s0 + $0x140] sm:$0xff]
  %v56 = vld [vmem:[%s0 + $0x148] sm:$0xff]
  %v57 = vld [vmem:[%s0 + $0x150] sm:$0xff]
  %v58 = vld [vmem:[%s0 + $0x158] sm:$0xff]
  %v59 = vld [vmem:[%s0 + $0x160] sm:$0xff]
  %v60 = vld [vmem:[%s0 + $0x168] sm:$0xff]
  %v61 = vld [vmem:[%s0 + $0x170] sm:$0xff]
  %v62 = vld [vmem:[%s0 + $0x178] sm:$0xff]
  %v63 = vld [vmem:[%s0 + $0x180] sm:$0xff]
  %v64 = vld [vmem:[%s0 + $0x188] sm:$0xff]
  %v65 = vld [vmem:[%s0 + $0x190] sm:$0xff]
  %v66 = vld [vmem:[%s0 + $0x198] sm:$0xff]
  %v67 = vld [vmem:[%s0 + $0x1a0] sm:$0xff]
  %v68 = vld [vmem:[%s0 + $0x1a8] sm:$0xff]
  %v69 = vld [vmem:[%s0 + $0x1b0] sm:$0xff]
  %v70 = vld [vmem:[%s0 + $0x1b8] sm:$0xff]
  %v71 = vld [vmem:[%s0 + $0x1c0] sm:$0xff]
  %v72 = vld [vmem:[%s0 + $0x1c8] sm:$0xff]
  %v73 = vld [vmem:[%s0 + $0x1d0] sm:$0xff]
  %v74 = vld [vmem:[%s0 + $0x1d8] sm:$0xff]
  %v75 = vld [vmem:[%s0 + $0x1e0] sm:$0xff]
  %v76 = vld [vmem:[%s0 + $0x1e8] sm:$0xff]
  %v77 = vld [vmem:[%s0 + $0x1f0] sm:$0xff]
  %v78 = vld [vmem:[%s0 + $0x1f8] sm:$0xff]
  %v79 = vld [vmem:[%s1] sm:$0xf]
  %v80 = vld [vmem:[%s1 + $0x4] sm:$0xf]
  %v81 = vld [vmem:[%s1 + $0x8] sm:$0xf]
  %v82 = vld [vmem:[%s1 + $0xc] sm:$0xf]
  %v83 = vld [vmem:[%s1 + $0x10] sm:$0xf]
  %v84 = vld [vmem:[%s1 + $0x14] sm:$0xf]
  %v85 = vld [vmem:[%s1 + $0x18] sm:$0xf]
  %v86 = vld [vmem:[%s1 + $0x1c] sm:$0xf]
  %v87 = vld [vmem:[%s1 + $0x20] sm:$0xf]
  %v88 = vld [vmem:[%s1 + $0x24] sm:$0xf]
  %v89 = vld [vmem:[%s1 + $0x28] sm:$0xf]
  %v90 = vld [vmem:[%s1 + $0x2c] sm:$0xf]
  %v91 = vld [vmem:[%s1 + $0x30] sm:$0xf]
  %v92 = vld [vmem:[%s1 + $0x34] sm:$0xf]
  %v93 = vld [vmem:[%s1 + $0x38] sm:$0xf]
  %v94 = vld [vmem:[%s1 + $0x3c] sm:$0xf]
  %v95 = vld [vmem:[%s1 + $0x40] sm:$0xf]
  %v96 = vld [vmem:[%s1 + $0x44] sm:$0xf]
  %v97 = vld [vmem:[%s1 + $0x48] sm:$0xf]
  %v98 = vld [vmem:[%s1 + $0x4c] sm:$0xf]
  %v99 = vld [vmem:[%s1 + $0x50] sm:$0xf]
  %v100 = vld [vmem:[%s1 + $0x54] sm:$0xf]
  %v101 = vld [vmem:[%s1 + $0x58] sm:$0xf]
  %v102 = vld [vmem:[%s1 + $0x5c] sm:$0xf]
  %v103 = vld [vmem:[%s1 + $0x60] sm:$0xf]
  %v104 = vld [vmem:[%s1 + $0x64] sm:$0xf]
  %v105 = vld [vmem:[%s1 + $0x68] sm:$0xf]
  %v106 = vld [vmem:[%s1 + $0x6c] sm:$0xf]
  %v107 = vld [vmem:[%s1 + $0x70] sm:$0xf]
  %v108 = vld [vmem:[%s1 + $0x74] sm:$0xf]
  %v109 = vld [vmem:[%s1 + $0x78] sm:$0xf]
  %v110 = vld [vmem:[%s1 + $0x7c] sm:$0xf]
  %v111 = vld [vmem:[%s2] sm:$0x1]
  %v113 = vlaneseq
  %v114 = vshrl.u32 %v113, 7
  %v115 = vsub.s32 0, %v114
  %v116 = vrot.slane %v111, %v115
  %v182 = vunpack.c.l.b16 %v15
  %v183 = vunpack.c.h.b16 %v15
  %v184 = vunpack.c.l.b16 %v16
  %v185 = vunpack.c.h.b16 %v16
  %v186 = vunpack.c.l.b16 %v17
  %v187 = vunpack.c.h.b16 %v17
  %v188 = vunpack.c.l.b16 %v18
  %v189 = vunpack.c.h.b16 %v18
  %v190 = vunpack.c.l.b16 %v19
  %v191 = vunpack.c.h.b16 %v19
  %v192 = vunpack.c.l.b16 %v20
  %v193 = vunpack.c.h.b16 %v20
  %v194 = vunpack.c.l.b16 %v21
  %v195 = vunpack.c.h.b16 %v21
  %v196 = vunpack.c.l.b16 %v22
  %v197 = vunpack.c.h.b16 %v22
  %v198 = vunpack.c.l.b16 %v23
  %v199 = vunpack.c.h.b16 %v23
  %v200 = vunpack.c.l.b16 %v24
  %v201 = vunpack.c.h.b16 %v24
  %v202 = vunpack.c.l.b16 %v25
  %v203 = vunpack.c.h.b16 %v25
  %v204 = vunpack.c.l.b16 %v26
  %v205 = vunpack.c.h.b16 %v26
  %v206 = vunpack.c.l.b16 %v27
  %v207 = vunpack.c.h.b16 %v27
  %v208 = vunpack.c.l.b16 %v28
  %v209 = vunpack.c.h.b16 %v28
  %v210 = vunpack.c.l.b16 %v29
  %v211 = vunpack.c.h.b16 %v29
  %v212 = vunpack.c.l.b16 %v30
  %v213 = vunpack.c.h.b16 %v30
  %v214 = vunpack.c.l.b16 %v31
  %v215 = vunpack.c.h.b16 %v31
  %v216 = vunpack.c.l.b16 %v32
  %v217 = vunpack.c.h.b16 %v32
  %v218 = vunpack.c.l.b16 %v33
  %v219 = vunpack.c.h.b16 %v33
  %v220 = vunpack.c.l.b16 %v34
  %v221 = vunpack.c.h.b16 %v34
  %v222 = vunpack.c.l.b16 %v35
  %v223 = vunpack.c.h.b16 %v35
  %v224 = vunpack.c.l.b16 %v36
  %v225 = vunpack.c.h.b16 %v36
  %v226 = vunpack.c.l.b16 %v37
  %v227 = vunpack.c.h.b16 %v37
  %v228 = vunpack.c.l.b16 %v38
  %v229 = vunpack.c.h.b16 %v38
  %v230 = vunpack.c.l.b16 %v39
  %v231 = vunpack.c.h.b16 %v39
  %v232 = vunpack.c.l.b16 %v40
  %v233 = vunpack.c.h.b16 %v40
  %v234 = vunpack.c.l.b16 %v41
  %v235 = vunpack.c.h.b16 %v41
  %v236 = vunpack.c.l.b16 %v42
  %v237 = vunpack.c.h.b16 %v42
  %v238 = vunpack.c.l.b16 %v43
  %v239 = vunpack.c.h.b16 %v43
  %v240 = vunpack.c.l.b16 %v44
  %v241 = vunpack.c.h.b16 %v44
  %v242 = vunpack.c.l.b16 %v45
  %v243 = vunpack.c.h.b16 %v45
  %v244 = vunpack.c.l.b16 %v46
  %v245 = vunpack.c.h.b16 %v46
  %v246 = vunpack.c.l.b16 %v47
  %v247 = vunpack.c.h.b16 %v47
  %v248 = vunpack.c.l.b16 %v48
  %v249 = vunpack.c.h.b16 %v48
  %v250 = vunpack.c.l.b16 %v49
  %v251 = vunpack.c.h.b16 %v49
  %v252 = vunpack.c.l.b16 %v50
  %v253 = vunpack.c.h.b16 %v50
  %v254 = vunpack.c.l.b16 %v51
  %v255 = vunpack.c.h.b16 %v51
  %v256 = vunpack.c.l.b16 %v52
  %v257 = vunpack.c.h.b16 %v52
  %v258 = vunpack.c.l.b16 %v53
  %v259 = vunpack.c.h.b16 %v53
  %v260 = vunpack.c.l.b16 %v54
  %v261 = vunpack.c.h.b16 %v54
  %v262 = vunpack.c.l.b16 %v55
  %v263 = vunpack.c.h.b16 %v55
  %v264 = vunpack.c.l.b16 %v56
  %v265 = vunpack.c.h.b16 %v56
  %v266 = vunpack.c.l.b16 %v57
  %v267 = vunpack.c.h.b16 %v57
  %v268 = vunpack.c.l.b16 %v58
  %v269 = vunpack.c.h.b16 %v58
  %v270 = vunpack.c.l.b16 %v59
  %v271 = vunpack.c.h.b16 %v59
  %v272 = vunpack.c.l.b16 %v60
  %v273 = vunpack.c.h.b16 %v60
  %v274 = vunpack.c.l.b16 %v61
  %v275 = vunpack.c.h.b16 %v61
  %v276 = vunpack.c.l.b16 %v62
  %v277 = vunpack.c.h.b16 %v62
  %v278 = vunpack.c.l.b16 %v63
  %v279 = vunpack.c.h.b16 %v63
  %v280 = vunpack.c.l.b16 %v64
  %v281 = vunpack.c.h.b16 %v64
  %v282 = vunpack.c.l.b16 %v65
  %v283 = vunpack.c.h.b16 %v65
  %v284 = vunpack.c.l.b16 %v66
  %v285 = vunpack.c.h.b16 %v66
  %v286 = vunpack.c.l.b16 %v67
  %v287 = vunpack.c.h.b16 %v67
  %v288 = vunpack.c.l.b16 %v68
  %v289 = vunpack.c.h.b16 %v68
  %v290 = vunpack.c.l.b16 %v69
  %v291 = vunpack.c.h.b16 %v69
  %v292 = vunpack.c.l.b16 %v70
  %v293 = vunpack.c.h.b16 %v70
  %v294 = vunpack.c.l.b16 %v71
  %v295 = vunpack.c.h.b16 %v71
  %v296 = vunpack.c.l.b16 %v72
  %v297 = vunpack.c.h.b16 %v72
  %v298 = vunpack.c.l.b16 %v73
  %v299 = vunpack.c.h.b16 %v73
  %v300 = vunpack.c.l.b16 %v74
  %v301 = vunpack.c.h.b16 %v74
  %v302 = vunpack.c.l.b16 %v75
  %v303 = vunpack.c.h.b16 %v75
  %v304 = vunpack.c.l.b16 %v76
  %v305 = vunpack.c.h.b16 %v76
  %v306 = vunpack.c.l.b16 %v77
  %v307 = vunpack.c.h.b16 %v77
  %v308 = vunpack.c.l.b16 %v78
  %v309 = vunpack.c.h.b16 %v78
  %v310 = vpack.c.b16 %v184, %v182
  %v311 = vpack.c.b16 %v185, %v183
  %v312 = vpack.c.b16 %v188, %v186
  %v313 = vpack.c.b16 %v189, %v187
  %v314 = vpack.c.b16 %v192, %v190
  %v315 = vpack.c.b16 %v193, %v191
  %v316 = vpack.c.b16 %v196, %v194
  %v317 = vpack.c.b16 %v197, %v195
  %v318 = vpack.c.b16 %v200, %v198
  %v319 = vpack.c.b16 %v201, %v199
  %v320 = vpack.c.b16 %v204, %v202
  %v321 = vpack.c.b16 %v205, %v203
  %v322 = vpack.c.b16 %v208, %v206
  %v323 = vpack.c.b16 %v209, %v207
  %v324 = vpack.c.b16 %v212, %v210
  %v325 = vpack.c.b16 %v213, %v211
  %v326 = vpack.c.b16 %v216, %v214
  %v327 = vpack.c.b16 %v217, %v215
  %v328 = vpack.c.b16 %v220, %v218
  %v329 = vpack.c.b16 %v221, %v219
  %v330 = vpack.c.b16 %v224, %v222
  %v331 = vpack.c.b16 %v225, %v223
  %v332 = vpack.c.b16 %v228, %v226
  %v333 = vpack.c.b16 %v229, %v227
  %v334 = vpack.c.b16 %v232, %v230
  %v335 = vpack.c.b16 %v233, %v231
  %v336 = vpack.c.b16 %v236, %v234
  %v337 = vpack.c.b16 %v237, %v235
  %v338 = vpack.c.b16 %v240, %v238
  %v339 = vpack.c.b16 %v241, %v239
  %v340 = vpack.c.b16 %v244, %v242
  %v341 = vpack.c.b16 %v245, %v243
  %v342 = vpack.c.b16 %v248, %v246
  %v343 = vpack.c.b16 %v249, %v247
  %v344 = vpack.c.b16 %v252, %v250
  %v345 = vpack.c.b16 %v253, %v251
  %v346 = vpack.c.b16 %v256, %v254
  %v347 = vpack.c.b16 %v257, %v255
  %v348 = vpack.c.b16 %v260, %v258
  %v349 = vpack.c.b16 %v261, %v259
  %v350 = vpack.c.b16 %v264, %v262
  %v351 = vpack.c.b16 %v265, %v263
  %v352 = vpack.c.b16 %v268, %v266
  %v353 = vpack.c.b16 %v269, %v267
  %v354 = vpack.c.b16 %v272, %v270
  %v355 = vpack.c.b16 %v273, %v271
  %v356 = vpack.c.b16 %v276, %v274
  %v357 = vpack.c.b16 %v277, %v275
  %v358 = vpack.c.b16 %v280, %v278
  %v359 = vpack.c.b16 %v281, %v279
  %v360 = vpack.c.b16 %v284, %v282
  %v361 = vpack.c.b16 %v285, %v283
  %v362 = vpack.c.b16 %v288, %v286
  %v363 = vpack.c.b16 %v289, %v287
  %v364 = vpack.c.b16 %v292, %v290
  %v365 = vpack.c.b16 %v293, %v291
  %v366 = vpack.c.b16 %v296, %v294
  %v367 = vpack.c.b16 %v297, %v295
  %v368 = vpack.c.b16 %v300, %v298
  %v369 = vpack.c.b16 %v301, %v299
  %v370 = vpack.c.b16 %v304, %v302
  %v371 = vpack.c.b16 %v305, %v303
  %v372 = vpack.c.b16 %v308, %v306
  %v373 = vpack.c.b16 %v309, %v307
  %v470 = vunpack.c.l.b16 %v79
  %v471 = vunpack.c.l.b16 %v80
  %v472 = vunpack.c.l.b16 %v81
  %v473 = vunpack.c.l.b16 %v82
  %v474 = vunpack.c.l.b16 %v83
  %v475 = vunpack.c.l.b16 %v84
  %v476 = vunpack.c.l.b16 %v85
  %v477 = vunpack.c.l.b16 %v86
  %v478 = vunpack.c.l.b16 %v87
  %v479 = vunpack.c.l.b16 %v88
  %v480 = vunpack.c.l.b16 %v89
  %v481 = vunpack.c.l.b16 %v90
  %v482 = vunpack.c.l.b16 %v91
  %v483 = vunpack.c.l.b16 %v92
  %v484 = vunpack.c.l.b16 %v93
  %v485 = vunpack.c.l.b16 %v94
  %v486 = vunpack.c.l.b16 %v95
  %v487 = vunpack.c.l.b16 %v96
  %v488 = vunpack.c.l.b16 %v97
  %v489 = vunpack.c.l.b16 %v98
  %v490 = vunpack.c.l.b16 %v99
  %v491 = vunpack.c.l.b16 %v100
  %v492 = vunpack.c.l.b16 %v101
  %v493 = vunpack.c.l.b16 %v102
  %v494 = vunpack.c.l.b16 %v103
  %v495 = vunpack.c.l.b16 %v104
  %v496 = vunpack.c.l.b16 %v105
  %v497 = vunpack.c.l.b16 %v106
  %v498 = vunpack.c.l.b16 %v107
  %v499 = vunpack.c.l.b16 %v108
  %v500 = vunpack.c.l.b16 %v109
  %v501 = vunpack.c.l.b16 %v110
  %v502 = vpack.c.b16 %v471, %v470
  %v503 = vpack.c.b16 %v473, %v472
  %v504 = vpack.c.b16 %v475, %v474
  %v505 = vpack.c.b16 %v477, %v476
  %v506 = vpack.c.b16 %v479, %v478
  %v507 = vpack.c.b16 %v481, %v480
  %v508 = vpack.c.b16 %v483, %v482
  %v509 = vpack.c.b16 %v485, %v484
  %v510 = vpack.c.b16 %v487, %v486
  %v511 = vpack.c.b16 %v489, %v488
  %v512 = vpack.c.b16 %v491, %v490
  %v513 = vpack.c.b16 %v493, %v492
  %v514 = vpack.c.b16 %v495, %v494
  %v515 = vpack.c.b16 %v497, %v496
  %v516 = vpack.c.b16 %v499, %v498
  %v517 = vpack.c.b16 %v501, %v500
  %534 = vmatprep.subr.bf16.mxu0 0
  %535 = vmatpush1.bf16.msra.mxu0 %v502
  %536 = vmatprep.subr.bf16.mxu0 0
  %537 = vmatpush1.bf16.msra.mxu0 %v503
  %538 = vmatprep.subr.bf16.mxu0 0
  %539 = vmatpush1.bf16.msra.mxu0 %v504
  %540 = vmatprep.subr.bf16.mxu0 0
  %541 = vmatpush1.bf16.msra.mxu0 %v505
  %542 = vmatprep.subr.bf16.mxu0 0
  %543 = vmatpush1.bf16.msra.mxu0 %v506
  %544 = vmatprep.subr.bf16.mxu0 0
  %545 = vmatpush1.bf16.msra.mxu0 %v507
  %546 = vmatprep.subr.bf16.mxu0 0
  %547 = vmatpush1.bf16.msra.mxu0 %v508
  %548 = vmatprep.subr.bf16.mxu0 0
  %549 = vmatpush1.bf16.msra.mxu0 %v509
  %550 = vmatprep.subr.bf16.mxu0 0
  %551 = vmatpush1.bf16.msra.mxu0 %v510
  %552 = vmatprep.subr.bf16.mxu0 0
  %553 = vmatpush1.bf16.msra.mxu0 %v511
  %554 = vmatprep.subr.bf16.mxu0 0
  %555 = vmatpush1.bf16.msra.mxu0 %v512
  %556 = vmatprep.subr.bf16.mxu0 0
  %557 = vmatpush1.bf16.msra.mxu0 %v513
  %558 = vmatprep.subr.bf16.mxu0 0
  %559 = vmatpush1.bf16.msra.mxu0 %v514
  %560 = vmatprep.subr.bf16.mxu0 0
  %561 = vmatpush1.bf16.msra.mxu0 %v515
  %562 = vmatprep.subr.bf16.mxu0 0
  %563 = vmatpush1.bf16.msra.mxu0 %v516
  %564 = vmatprep.subr.bf16.mxu0 0
  %565 = vmatpush1.bf16.msra.mxu0 %v517
  %566 = vmatprep.mubr.bf16.mxu0 %v311
  %567 = vmatmul.mubr.bf16.gmra.mrb[0].mxu0 %v310
  %v568 = vpop.f32.mrb[0].mxu0
  %v569 = vadd.f32 %v116, %v568
  %v570 = vpop.f32.mrb[0].mxu0
  %v571 = vpop.f32.mrb[0].mxu0
  %v572 = vadd.f32 %v116, %v571
  %v573 = vpop.f32.mrb[0].mxu0
  %574 = vmatprep.mubr.bf16.mxu0 %v313
  %575 = vmatmul.mubr.bf16.gmra.mrb[0].mxu0 %v312
  %v576 = vpop.f32.mrb[0].mxu0
  %v577 = vadd.f32 %v116, %v576
  %v578 = vpop.f32.mrb[0].mxu0
  %v579 = vpop.f32.mrb[0].mxu0
  %v580 = vadd.f32 %v116, %v579
  %v581 = vpop.f32.mrb[0].mxu0
  %582 = vmatprep.mubr.bf16.mxu0 %v315
  %583 = vmatmul.mubr.bf16.gmra.mrb[0].mxu0 %v314
  %v584 = vpop.f32.mrb[0].mxu0
  %v585 = vadd.f32 %v116, %v584
  %v586 = vpop.f32.mrb[0].mxu0
  %v587 = vpop.f32.mrb[0].mxu0
  %v588 = vadd.f32 %v116, %v587
  %v589 = vpop.f32.mrb[0].mxu0
  %590 = vmatprep.mubr.bf16.mxu0 %v317
  %591 = vmatmul.mubr.bf16.gmra.mrb[0].mxu0 %v316
  %v592 = vpop.f32.mrb[0].mxu0
  %v593 = vadd.f32 %v116, %v592
  %v594 = vpop.f32.mrb[0].mxu0
  %v595 = vpop.f32.mrb[0].mxu0
  %v596 = vadd.f32 %v116, %v595
  %v597 = vpop.f32.mrb[0].mxu0
  %598 = vmatprep.mubr.bf16.mxu0 %v319
  %599 = vmatmul.mubr.bf16.gmra.mrb[0].mxu0 %v318
  %v600 = vpop.f32.mrb[0].mxu0
  %v601 = vadd.f32 %v116, %v600
  %v602 = vpop.f32.mrb[0].mxu0
  %v603 = vpop.f32.mrb[0].mxu0
  %v604 = vadd.f32 %v116, %v603
  %v605 = vpop.f32.mrb[0].mxu0
  %606 = vmatprep.mubr.bf16.mxu0 %v321
  %607 = vmatmul.mubr.bf16.gmra.mrb[0].mxu0 %v320
  %v608 = vpop.f32.mrb[0].mxu0
  %v609 = vadd.f32 %v116, %v608
  %v610 = vpop.f32.mrb[0].mxu0
  %v611 = vpop.f32.mrb[0].mxu0
  %v612 = vadd.f32 %v116, %v611
  %v613 = vpop.f32.mrb[0].mxu0
  %614 = vmatprep.mubr.bf16.mxu0 %v323
  %615 = vmatmul.mubr.bf16.gmra.mrb[0].mxu0 %v322
  %v616 = vpop.f32.mrb[0].mxu0
  %v617 = vadd.f32 %v116, %v616
  %v618 = vpop.f32.mrb[0].mxu0
  %v619 = vpop.f32.mrb[0].mxu0
  %v620 = vadd.f32 %v116, %v619
  %v621 = vpop.f32.mrb[0].mxu0
  %622 = vmatprep.mubr.bf16.mxu0 %v325
  %623 = vmatmul.mubr.bf16.gmra.mrb[0].mxu0 %v324
  %v624 = vpop.f32.mrb[0].mxu0
  %v625 = vadd.f32 %v116, %v624
  %v626 = vpop.f32.mrb[0].mxu0
  %v627 = vpop.f32.mrb[0].mxu0
  %v628 = vadd.f32 %v116, %v627
  %v629 = vpop.f32.mrb[0].mxu0
  %630 = vmatprep.mubr.bf16.mxu0 %v327
  %631 = vmatmul.mubr.bf16.gmra.mrb[0].mxu0 %v326
  %v632 = vpop.f32.mrb[0].mxu0
  %v633 = vadd.f32 %v116, %v632
  %v634 = vpop.f32.mrb[0].mxu0
  %v635 = vpop.f32.mrb[0].mxu0
  %v636 = vadd.f32 %v116, %v635
  %v637 = vpop.f32.mrb[0].mxu0
  %638 = vmatprep.mubr.bf16.mxu0 %v329
  %639 = vmatmul.mubr.bf16.gmra.mrb[0].mxu0 %v328
  %v640 = vpop.f32.mrb[0].mxu0
  %v641 = vadd.f32 %v116, %v640
  %v642 = vpop.f32.mrb[0].mxu0
  %v643 = vpop.f32.mrb[0].mxu0
  %v644 = vadd.f32 %v116, %v643
  %v645 = vpop.f32.mrb[0].mxu0
  %646 = vmatprep.mubr.bf16.mxu0 %v331
  %647 = vmatmul.mubr.bf16.gmra.mrb[0].mxu0 %v330
  %v648 = vpop.f32.mrb[0].mxu0
  %v649 = vadd.f32 %v116, %v648
  %v650 = vpop.f32.mrb[0].mxu0
  %v651 = vpop.f32.mrb[0].mxu0
  %v652 = vadd.f32 %v116, %v651
  %v653 = vpop.f32.mrb[0].mxu0
  %654 = vmatprep.mubr.bf16.mxu0 %v333
  %655 = vmatmul.mubr.bf16.gmra.mrb[0].mxu0 %v332
  %v656 = vpop.f32.mrb[0].mxu0
  %v657 = vadd.f32 %v116, %v656
  %v658 = vpop.f32.mrb[0].mxu0
  %v659 = vpop.f32.mrb[0].mxu0
  %v660 = vadd.f32 %v116, %v659
  %v661 = vpop.f32.mrb[0].mxu0
  %662 = vmatprep.mubr.bf16.mxu0 %v335
  %663 = vmatmul.mubr.bf16.gmra.mrb[0].mxu0 %v334
  %v664 = vpop.f32.mrb[0].mxu0
  %v665 = vadd.f32 %v116, %v664
  %v666 = vpop.f32.mrb[0].mxu0
  %v667 = vpop.f32.mrb[0].mxu0
  %v668 = vadd.f32 %v116, %v667
  %v669 = vpop.f32.mrb[0].mxu0
  %670 = vmatprep.mubr.bf16.mxu0 %v337
  %671 = vmatmul.mubr.bf16.gmra.mrb[0].mxu0 %v336
  %v672 = vpop.f32.mrb[0].mxu0
  %v673 = vadd.f32 %v116, %v672
  %v674 = vpop.f32.mrb[0].mxu0
  %v675 = vpop.f32.mrb[0].mxu0
  %v676 = vadd.f32 %v116, %v675
  %v677 = vpop.f32.mrb[0].mxu0
  %678 = vmatprep.mubr.bf16.mxu0 %v339
  %679 = vmatmul.mubr.bf16.gmra.mrb[0].mxu0 %v338
  %v680 = vpop.f32.mrb[0].mxu0
  %v681 = vadd.f32 %v116, %v680
  %v682 = vpop.f32.mrb[0].mxu0
  %v683 = vpop.f32.mrb[0].mxu0
  %v684 = vadd.f32 %v116, %v683
  %v685 = vpop.f32.mrb[0].mxu0
  %686 = vmatprep.mubr.bf16.mxu0 %v341
  %687 = vmatmul.mubr.bf16.gmra.mrb[0].mxu0 %v340
  %v688 = vpop.f32.mrb[0].mxu0
  %v689 = vadd.f32 %v116, %v688
  %v690 = vpop.f32.mrb[0].mxu0
  %v691 = vpop.f32.mrb[0].mxu0
  %v692 = vadd.f32 %v116, %v691
  %v693 = vpop.f32.mrb[0].mxu0
  %694 = vmatprep.mubr.bf16.mxu0 %v343
  %695 = vmatmul.mubr.bf16.gmra.mrb[0].mxu0 %v342
  %v696 = vpop.f32.mrb[0].mxu0
  %v697 = vadd.f32 %v116, %v696
  %v698 = vpop.f32.mrb[0].mxu0
  %v699 = vpop.f32.mrb[0].mxu0
  %v700 = vadd.f32 %v116, %v699
  %v701 = vpop.f32.mrb[0].mxu0
  %702 = vmatprep.mubr.bf16.mxu0 %v345
  %703 = vmatmul.mubr.bf16.gmra.mrb[0].mxu0 %v344
  %v704 = vpop.f32.mrb[0].mxu0
  %v705 = vadd.f32 %v116, %v704
  %v706 = vpop.f32.mrb[0].mxu0
  %v707 = vpop.f32.mrb[0].mxu0
  %v708 = vadd.f32 %v116, %v707
  %v709 = vpop.f32.mrb[0].mxu0
  %710 = vmatprep.mubr.bf16.mxu0 %v347
  %711 = vmatmul.mubr.bf16.gmra.mrb[0].mxu0 %v346
  %v712 = vpop.f32.mrb[0].mxu0
  %v713 = vadd.f32 %v116, %v712
  %v714 = vpop.f32.mrb[0].mxu0
  %v715 = vpop.f32.mrb[0].mxu0
  %v716 = vadd.f32 %v116, %v715
  %v717 = vpop.f32.mrb[0].mxu0
  %718 = vmatprep.mubr.bf16.mxu0 %v349
  %719 = vmatmul.mubr.bf16.gmra.mrb[0].mxu0 %v348
  %v720 = vpop.f32.mrb[0].mxu0
  %v721 = vadd.f32 %v116, %v720
  %v722 = vpop.f32.mrb[0].mxu0
  %v723 = vpop.f32.mrb[0].mxu0
  %v724 = vadd.f32 %v116, %v723
  %v725 = vpop.f32.mrb[0].mxu0
  %726 = vmatprep.mubr.bf16.mxu0 %v351
  %727 = vmatmul.mubr.bf16.gmra.mrb[0].mxu0 %v350
  %v728 = vpop.f32.mrb[0].mxu0
  %v729 = vadd.f32 %v116, %v728
  %v730 = vpop.f32.mrb[0].mxu0
  %v731 = vpop.f32.mrb[0].mxu0
  %v732 = vadd.f32 %v116, %v731
  %v733 = vpop.f32.mrb[0].mxu0
  %734 = vmatprep.mubr.bf16.mxu0 %v353
  %735 = vmatmul.mubr.bf16.gmra.mrb[0].mxu0 %v352
  %v736 = vpop.f32.mrb[0].mxu0
  %v737 = vadd.f32 %v116, %v736
  %v738 = vpop.f32.mrb[0].mxu0
  %v739 = vpop.f32.mrb[0].mxu0
  %v740 = vadd.f32 %v116, %v739
  %v741 = vpop.f32.mrb[0].mxu0
  %742 = vmatprep.mubr.bf16.mxu0 %v355
  %743 = vmatmul.mubr.bf16.gmra.mrb[0].mxu0 %v354
  %v744 = vpop.f32.mrb[0].mxu0
  %v745 = vadd.f32 %v116, %v744
  %v746 = vpop.f32.mrb[0].mxu0
  %v747 = vpop.f32.mrb[0].mxu0
  %v748 = vadd.f32 %v116, %v747
  %v749 = vpop.f32.mrb[0].mxu0
  %750 = vmatprep.mubr.bf16.mxu0 %v357
  %751 = vmatmul.mubr.bf16.gmra.mrb[0].mxu0 %v356
  %v752 = vpop.f32.mrb[0].mxu0
  %v753 = vadd.f32 %v116, %v752
  %v754 = vpop.f32.mrb[0].mxu0
  %v755 = vpop.f32.mrb[0].mxu0
  %v756 = vadd.f32 %v116, %v755
  %v757 = vpop.f32.mrb[0].mxu0
  %758 = vmatprep.mubr.bf16.mxu0 %v359
  %759 = vmatmul.mubr.bf16.gmra.mrb[0].mxu0 %v358
  %v760 = vpop.f32.mrb[0].mxu0
  %v761 = vadd.f32 %v116, %v760
  %v762 = vpop.f32.mrb[0].mxu0
  %v763 = vpop.f32.mrb[0].mxu0
  %v764 = vadd.f32 %v116, %v763
  %v765 = vpop.f32.mrb[0].mxu0
  %766 = vmatprep.mubr.bf16.mxu0 %v361
  %767 = vmatmul.mubr.bf16.gmra.mrb[0].mxu0 %v360
  %v768 = vpop.f32.mrb[0].mxu0
  %v769 = vadd.f32 %v116, %v768
  %v770 = vpop.f32.mrb[0].mxu0
  %v771 = vpop.f32.mrb[0].mxu0
  %v772 = vadd.f32 %v116, %v771
  %v773 = vpop.f32.mrb[0].mxu0
  %774 = vmatprep.mubr.bf16.mxu0 %v363
  %775 = vmatmul.mubr.bf16.gmra.mrb[0].mxu0 %v362
  %v776 = vpop.f32.mrb[0].mxu0
  %v777 = vadd.f32 %v116, %v776
  %v778 = vpop.f32.mrb[0].mxu0
  %v779 = vpop.f32.mrb[0].mxu0
  %v780 = vadd.f32 %v116, %v779
  %v781 = vpop.f32.mrb[0].mxu0
  %782 = vmatprep.mubr.bf16.mxu0 %v365
  %783 = vmatmul.mubr.bf16.gmra.mrb[0].mxu0 %v364
  %v784 = vpop.f32.mrb[0].mxu0
  %v785 = vadd.f32 %v116, %v784
  %v786 = vpop.f32.mrb[0].mxu0
  %v787 = vpop.f32.mrb[0].mxu0
  %v788 = vadd.f32 %v116, %v787
  %v789 = vpop.f32.mrb[0].mxu0
  %790 = vmatprep.mubr.bf16.mxu0 %v367
  %791 = vmatmul.mubr.bf16.gmra.mrb[0].mxu0 %v366
  %v792 = vpop.f32.mrb[0].mxu0
  %v793 = vadd.f32 %v116, %v792
  %v794 = vpop.f32.mrb[0].mxu0
  %v795 = vpop.f32.mrb[0].mxu0
  %v796 = vadd.f32 %v116, %v795
  %v797 = vpop.f32.mrb[0].mxu0
  %798 = vmatprep.mubr.bf16.mxu0 %v369
  %799 = vmatmul.mubr.bf16.gmra.mrb[0].mxu0 %v368
  %v800 = vpop.f32.mrb[0].mxu0
  %v801 = vadd.f32 %v116, %v800
  %v802 = vpop.f32.mrb[0].mxu0
  %v803 = vpop.f32.mrb[0].mxu0
  %v804 = vadd.f32 %v116, %v803
  %v805 = vpop.f32.mrb[0].mxu0
  %806 = vmatprep.mubr.bf16.mxu0 %v371
  %807 = vmatmul.mubr.bf16.gmra.mrb[0].mxu0 %v370
  %v808 = vpop.f32.mrb[0].mxu0
  %v809 = vadd.f32 %v116, %v808
  %v810 = vpop.f32.mrb[0].mxu0
  %v811 = vpop.f32.mrb[0].mxu0
  %v812 = vadd.f32 %v116, %v811
  %v813 = vpop.f32.mrb[0].mxu0
  %814 = vmatprep.mubr.bf16.mxu0 %v373
  %815 = vmatmul.mubr.bf16.gmra.mrb[0].mxu0 %v372
  %v816 = vpop.f32.mrb[0].mxu0
  %v817 = vadd.f32 %v116, %v816
  %v818 = vpop.f32.mrb[0].mxu0
  %v819 = vpop.f32.mrb[0].mxu0
  %v820 = vadd.f32 %v116, %v819
  %v821 = vpop.f32.mrb[0].mxu0
  %822 = vdwg.mxu0
  %v823 = vmax.f32 %v569, 0.0
  %v824 = vmax.f32 %v572, 0.0
  %v825 = vmax.f32 %v577, 0.0
  %v826 = vmax.f32 %v580, 0.0
  %v827 = vmax.f32 %v585, 0.0
  %v828 = vmax.f32 %v588, 0.0
  %v829 = vmax.f32 %v593, 0.0
  %v830 = vmax.f32 %v596, 0.0
  %v831 = vmax.f32 %v601, 0.0
  %v832 = vmax.f32 %v604, 0.0
  %v833 = vmax.f32 %v609, 0.0
  %v834 = vmax.f32 %v612, 0.0
  %v835 = vmax.f32 %v617, 0.0
  %v836 = vmax.f32 %v620, 0.0
  %v837 = vmax.f32 %v625, 0.0
  %v838 = vmax.f32 %v628, 0.0
  %v839 = vmax.f32 %v633, 0.0
  %v840 = vmax.f32 %v636, 0.0
  %v841 = vmax.f32 %v641, 0.0
  %v842 = vmax.f32 %v644, 0.0
  %v843 = vmax.f32 %v649, 0.0
  %v844 = vmax.f32 %v652, 0.0
  %v845 = vmax.f32 %v657, 0.0
  %v846 = vmax.f32 %v660, 0.0
  %v847 = vmax.f32 %v665, 0.0
  %v848 = vmax.f32 %v668, 0.0
  %v849 = vmax.f32 %v673, 0.0
  %v850 = vmax.f32 %v676, 0.0
  %v851 = vmax.f32 %v681, 0.0
  %v852 = vmax.f32 %v684, 0.0
  %v853 = vmax.f32 %v689, 0.0
  %v854 = vmax.f32 %v692, 0.0
  %v855 = vmax.f32 %v697, 0.0
  %v856 = vmax.f32 %v700, 0.0
  %v857 = vmax.f32 %v705, 0.0
  %v858 = vmax.f32 %v708, 0.0
  %v859 = vmax.f32 %v713, 0.0
  %v860 = vmax.f32 %v716, 0.0
  %v861 = vmax.f32 %v721, 0.0
  %v862 = vmax.f32 %v724, 0.0
  %v863 = vmax.f32 %v729, 0.0
  %v864 = vmax.f32 %v732, 0.0
  %v865 = vmax.f32 %v737, 0.0
  %v866 = vmax.f32 %v740, 0.0
  %v867 = vmax.f32 %v745, 0.0
  %v868 = vmax.f32 %v748, 0.0
  %v869 = vmax.f32 %v753, 0.0
  %v870 = vmax.f32 %v756, 0.0
  %v871 = vmax.f32 %v761, 0.0
  %v872 = vmax.f32 %v764, 0.0
  %v873 = vmax.f32 %v769, 0.0
  %v874 = vmax.f32 %v772, 0.0
  %v875 = vmax.f32 %v777, 0.0
  %v876 = vmax.f32 %v780, 0.0
  %v877 = vmax.f32 %v785, 0.0
  %v878 = vmax.f32 %v788, 0.0
  %v879 = vmax.f32 %v793, 0.0
  %v880 = vmax.f32 %v796, 0.0
  %v881 = vmax.f32 %v801, 0.0
  %v882 = vmax.f32 %v804, 0.0
  %v883 = vmax.f32 %v809, 0.0
  %v884 = vmax.f32 %v812, 0.0
  %v885 = vmax.f32 %v817, 0.0
  %v886 = vmax.f32 %v820, 0.0
  %v887 = vpack.c.bf16 %v824, %v823
  %v888 = vpack.c.bf16 %v826, %v825
  %v889 = vpack.c.bf16 %v828, %v827
  %v890 = vpack.c.bf16 %v830, %v829
  %v891 = vpack.c.bf16 %v832, %v831
  %v892 = vpack.c.bf16 %v834, %v833
  %v893 = vpack.c.bf16 %v836, %v835
  %v894 = vpack.c.bf16 %v838, %v837
  %v895 = vpack.c.bf16 %v840, %v839
  %v896 = vpack.c.bf16 %v842, %v841
  %v897 = vpack.c.bf16 %v844, %v843
  %v898 = vpack.c.bf16 %v846, %v845
  %v899 = vpack.c.bf16 %v848, %v847
  %v900 = vpack.c.bf16 %v850, %v849
  %v901 = vpack.c.bf16 %v852, %v851
  %v902 = vpack.c.bf16 %v854, %v853
  %v903 = vpack.c.bf16 %v856, %v855
  %v904 = vpack.c.bf16 %v858, %v857
  %v905 = vpack.c.bf16 %v860, %v859
  %v906 = vpack.c.bf16 %v862, %v861
  %v907 = vpack.c.bf16 %v864, %v863
  %v908 = vpack.c.bf16 %v866, %v865
  %v909 = vpack.c.bf16 %v868, %v867
  %v910 = vpack.c.bf16 %v870, %v869
  %v911 = vpack.c.bf16 %v872, %v871
  %v912 = vpack.c.bf16 %v874, %v873
  %v913 = vpack.c.bf16 %v876, %v875
  %v914 = vpack.c.bf16 %v878, %v877
  %v915 = vpack.c.bf16 %v880, %v879
  %v916 = vpack.c.bf16 %v882, %v881
  %v917 = vpack.c.bf16 %v884, %v883
  %v918 = vpack.c.bf16 %v886, %v885
  %v951 = vunpack.c.l.b16 %v887
  %v952 = vunpack.c.h.b16 %v887
  %v953 = vunpack.c.l.b16 %v888
  %v954 = vunpack.c.h.b16 %v888
  %v955 = vunpack.c.l.b16 %v889
  %v956 = vunpack.c.h.b16 %v889
  %v957 = vunpack.c.l.b16 %v890
  %v958 = vunpack.c.h.b16 %v890
  %v959 = vunpack.c.l.b16 %v891
  %v960 = vunpack.c.h.b16 %v891
  %v961 = vunpack.c.l.b16 %v892
  %v962 = vunpack.c.h.b16 %v892
  %v963 = vunpack.c.l.b16 %v893
  %v964 = vunpack.c.h.b16 %v893
  %v965 = vunpack.c.l.b16 %v894
  %v966 = vunpack.c.h.b16 %v894
  %v967 = vunpack.c.l.b16 %v895
  %v968 = vunpack.c.h.b16 %v895
  %v969 = vunpack.c.l.b16 %v896
  %v970 = vunpack.c.h.b16 %v896
  %v971 = vunpack.c.l.b16 %v897
  %v972 = vunpack.c.h.b16 %v897
  %v973 = vunpack.c.l.b16 %v898
  %v974 = vunpack.c.h.b16 %v898
  %v975 = vunpack.c.l.b16 %v899
  %v976 = vunpack.c.h.b16 %v899
  %v977 = vunpack.c.l.b16 %v900
  %v978 = vunpack.c.h.b16 %v900
  %v979 = vunpack.c.l.b16 %v901
  %v980 = vunpack.c.h.b16 %v901
  %v981 = vunpack.c.l.b16 %v902
  %v982 = vunpack.c.h.b16 %v902
  %v983 = vunpack.c.l.b16 %v903
  %v984 = vunpack.c.h.b16 %v903
  %v985 = vunpack.c.l.b16 %v904
  %v986 = vunpack.c.h.b16 %v904
  %v987 = vunpack.c.l.b16 %v905
  %v988 = vunpack.c.h.b16 %v905
  %v989 = vunpack.c.l.b16 %v906
  %v990 = vunpack.c.h.b16 %v906
  %v991 = vunpack.c.l.b16 %v907
  %v992 = vunpack.c.h.b16 %v907
  %v993 = vunpack.c.l.b16 %v908
  %v994 = vunpack.c.h.b16 %v908
  %v995 = vunpack.c.l.b16 %v909
  %v996 = vunpack.c.h.b16 %v909
  %v997 = vunpack.c.l.b16 %v910
  %v998 = vunpack.c.h.b16 %v910
  %v999 = vunpack.c.l.b16 %v911
  %v1000 = vunpack.c.h.b16 %v911
  %v1001 = vunpack.c.l.b16 %v912
  %v1002 = vunpack.c.h.b16 %v912
  %v1003 = vunpack.c.l.b16 %v913
  %v1004 = vunpack.c.h.b16 %v913
  %v1005 = vunpack.c.l.b16 %v914
  %v1006 = vunpack.c.h.b16 %v914
  %v1007 = vunpack.c.l.b16 %v915
  %v1008 = vunpack.c.h.b16 %v915
  %v1009 = vunpack.c.l.b16 %v916
  %v1010 = vunpack.c.h.b16 %v916
  %v1011 = vunpack.c.l.b16 %v917
  %v1012 = vunpack.c.h.b16 %v917
  %v1013 = vunpack.c.l.b16 %v918
  %v1014 = vunpack.c.h.b16 %v918
  %v1015 = vpack.c.b16 %v951, %v951
  %v1016 = vpack.c.b16 %v952, %v952
  %v1017 = vpack.c.b16 %v953, %v953
  %v1018 = vpack.c.b16 %v954, %v954
  %v1019 = vpack.c.b16 %v955, %v955
  %v1020 = vpack.c.b16 %v956, %v956
  %v1021 = vpack.c.b16 %v957, %v957
  %v1022 = vpack.c.b16 %v958, %v958
  %v1023 = vpack.c.b16 %v959, %v959
  %v1024 = vpack.c.b16 %v960, %v960
  %v1025 = vpack.c.b16 %v961, %v961
  %v1026 = vpack.c.b16 %v962, %v962
  %v1027 = vpack.c.b16 %v963, %v963
  %v1028 = vpack.c.b16 %v964, %v964
  %v1029 = vpack.c.b16 %v965, %v965
  %v1030 = vpack.c.b16 %v966, %v966
  %v1031 = vpack.c.b16 %v967, %v967
  %v1032 = vpack.c.b16 %v968, %v968
  %v1033 = vpack.c.b16 %v969, %v969
  %v1034 = vpack.c.b16 %v970, %v970
  %v1035 = vpack.c.b16 %v971, %v971
  %v1036 = vpack.c.b16 %v972, %v972
  %v1037 = vpack.c.b16 %v973, %v973
  %v1038 = vpack.c.b16 %v974, %v974
  %v1039 = vpack.c.b16 %v975, %v975
  %v1040 = vpack.c.b16 %v976, %v976
  %v1041 = vpack.c.b16 %v977, %v977
  %v1042 = vpack.c.b16 %v978, %v978
  %v1043 = vpack.c.b16 %v979, %v979
  %v1044 = vpack.c.b16 %v980, %v980
  %v1045 = vpack.c.b16 %v981, %v981
  %v1046 = vpack.c.b16 %v982, %v982
  %v1047 = vpack.c.b16 %v983, %v983
  %v1048 = vpack.c.b16 %v984, %v984
  %v1049 = vpack.c.b16 %v985, %v985
  %v1050 = vpack.c.b16 %v986, %v986
  %v1051 = vpack.c.b16 %v987, %v987
  %v1052 = vpack.c.b16 %v988, %v988
  %v1053 = vpack.c.b16 %v989, %v989
  %v1054 = vpack.c.b16 %v990, %v990
  %v1055 = vpack.c.b16 %v991, %v991
  %v1056 = vpack.c.b16 %v992, %v992
  %v1057 = vpack.c.b16 %v993, %v993
  %v1058 = vpack.c.b16 %v994, %v994
  %v1059 = vpack.c.b16 %v995, %v995
  %v1060 = vpack.c.b16 %v996, %v996
  %v1061 = vpack.c.b16 %v997, %v997
  %v1062 = vpack.c.b16 %v998, %v998
  %v1063 = vpack.c.b16 %v999, %v999
  %v1064 = vpack.c.b16 %v1000, %v1000
  %v1065 = vpack.c.b16 %v1001, %v1001
  %v1066 = vpack.c.b16 %v1002, %v1002
  %v1067 = vpack.c.b16 %v1003, %v1003
  %v1068 = vpack.c.b16 %v1004, %v1004
  %v1069 = vpack.c.b16 %v1005, %v1005
  %v1070 = vpack.c.b16 %v1006, %v1006
  %v1071 = vpack.c.b16 %v1007, %v1007
  %v1072 = vpack.c.b16 %v1008, %v1008
  %v1073 = vpack.c.b16 %v1009, %v1009
  %v1074 = vpack.c.b16 %v1010, %v1010
  %v1075 = vpack.c.b16 %v1011, %v1011
  %v1076 = vpack.c.b16 %v1012, %v1012
  %v1077 = vpack.c.b16 %v1013, %v1013
  %v1078 = vpack.c.b16 %v1014, %v1014
  %vm1143 = vcmask 519168
  %1144 = vst.msk [vmem:[%s3] sm:$0xf] %vm1143, %v1015
  %1145 = vst.msk [vmem:[%s3 + $0x4] sm:$0xf] %vm1143, %v1016
  %1146 = vst.msk [vmem:[%s3 + $0x8] sm:$0xf] %vm1143, %v1017
  %1147 = vst.msk [vmem:[%s3 + $0xc] sm:$0xf] %vm1143, %v1018
  %1148 = vst.msk [vmem:[%s3 + $0x10] sm:$0xf] %vm1143, %v1019
  %1149 = vst.msk [vmem:[%s3 + $0x14] sm:$0xf] %vm1143, %v1020
  %1150 = vst.msk [vmem:[%s3 + $0x18] sm:$0xf] %vm1143, %v1021
  %1151 = vst.msk [vmem:[%s3 + $0x1c] sm:$0xf] %vm1143, %v1022
  %1152 = vst.msk [vmem:[%s3 + $0x20] sm:$0xf] %vm1143, %v1023
  %1153 = vst.msk [vmem:[%s3 + $0x24] sm:$0xf] %vm1143, %v1024
  %1154 = vst.msk [vmem:[%s3 + $0x28] sm:$0xf] %vm1143, %v1025
  %1155 = vst.msk [vmem:[%s3 + $0x2c] sm:$0xf] %vm1143, %v1026
  %1156 = vst.msk [vmem:[%s3 + $0x30] sm:$0xf] %vm1143, %v1027
  %1157 = vst.msk [vmem:[%s3 + $0x34] sm:$0xf] %vm1143, %v1028
  %1158 = vst.msk [vmem:[%s3 + $0x38] sm:$0xf] %vm1143, %v1029
  %1159 = vst.msk [vmem:[%s3 + $0x3c] sm:$0xf] %vm1143, %v1030
  %1160 = vst.msk [vmem:[%s3 + $0x40] sm:$0xf] %vm1143, %v1031
  %1161 = vst.msk [vmem:[%s3 + $0x44] sm:$0xf] %vm1143, %v1032
  %1162 = vst.msk [vmem:[%s3 + $0x48] sm:$0xf] %vm1143, %v1033
  %1163 = vst.msk [vmem:[%s3 + $0x4c] sm:$0xf] %vm1143, %v1034
  %1164 = vst.msk [vmem:[%s3 + $0x50] sm:$0xf] %vm1143, %v1035
  %1165 = vst.msk [vmem:[%s3 + $0x54] sm:$0xf] %vm1143, %v1036
  %1166 = vst.msk [vmem:[%s3 + $0x58] sm:$0xf] %vm1143, %v1037
  %1167 = vst.msk [vmem:[%s3 + $0x5c] sm:$0xf] %vm1143, %v1038
  %1168 = vst.msk [vmem:[%s3 + $0x60] sm:$0xf] %vm1143, %v1039
  %1169 = vst.msk [vmem:[%s3 + $0x64] sm:$0xf] %vm1143, %v1040
  %1170 = vst.msk [vmem:[%s3 + $0x68] sm:$0xf] %vm1143, %v1041
  %1171 = vst.msk [vmem:[%s3 + $0x6c] sm:$0xf] %vm1143, %v1042
  %1172 = vst.msk [vmem:[%s3 + $0x70] sm:$0xf] %vm1143, %v1043
  %1173 = vst.msk [vmem:[%s3 + $0x74] sm:$0xf] %vm1143, %v1044
  %1174 = vst.msk [vmem:[%s3 + $0x78] sm:$0xf] %vm1143, %v1045
  %1175 = vst.msk [vmem:[%s3 + $0x7c] sm:$0xf] %vm1143, %v1046
  %1176 = vst.msk [vmem:[%s3 + $0x80] sm:$0xf] %vm1143, %v1047
  %1177 = vst.msk [vmem:[%s3 + $0x84] sm:$0xf] %vm1143, %v1048
  %1178 = vst.msk [vmem:[%s3 + $0x88] sm:$0xf] %vm1143, %v1049
  %1179 = vst.msk [vmem:[%s3 + $0x8c] sm:$0xf] %vm1143, %v1050
  %1180 = vst.msk [vmem:[%s3 + $0x90] sm:$0xf] %vm1143, %v1051
  %1181 = vst.msk [vmem:[%s3 + $0x94] sm:$0xf] %vm1143, %v1052
  %1182 = vst.msk [vmem:[%s3 + $0x98] sm:$0xf] %vm1143, %v1053
  %1183 = vst.msk [vmem:[%s3 + $0x9c] sm:$0xf] %vm1143, %v1054
  %1184 = vst.msk [vmem:[%s3 + $0xa0] sm:$0xf] %vm1143, %v1055
  %1185 = vst.msk [vmem:[%s3 + $0xa4] sm:$0xf] %vm1143, %v1056
  %1186 = vst.msk [vmem:[%s3 + $0xa8] sm:$0xf] %vm1143, %v1057
  %1187 = vst.msk [vmem:[%s3 + $0xac] sm:$0xf] %vm1143, %v1058
  %1188 = vst.msk [vmem:[%s3 + $0xb0] sm:$0xf] %vm1143, %v1059
  %1189 = vst.msk [vmem:[%s3 + $0xb4] sm:$0xf] %vm1143, %v1060
  %1190 = vst.msk [vmem:[%s3 + $0xb8] sm:$0xf] %vm1143, %v1061
  %1191 = vst.msk [vmem:[%s3 + $0xbc] sm:$0xf] %vm1143, %v1062
  %1192 = vst.msk [vmem:[%s3 + $0xc0] sm:$0xf] %vm1143, %v1063
  %1193 = vst.msk [vmem:[%s3 + $0xc4] sm:$0xf] %vm1143, %v1064
  %1194 = vst.msk [vmem:[%s3 + $0xc8] sm:$0xf] %vm1143, %v1065
  %1195 = vst.msk [vmem:[%s3 + $0xcc] sm:$0xf] %vm1143, %v1066
  %1196 = vst.msk [vmem:[%s3 + $0xd0] sm:$0xf] %vm1143, %v1067
  %1197 = vst.msk [vmem:[%s3 + $0xd4] sm:$0xf] %vm1143, %v1068
  %1198 = vst.msk [vmem:[%s3 + $0xd8] sm:$0xf] %vm1143, %v1069
  %1199 = vst.msk [vmem:[%s3 + $0xdc] sm:$0xf] %vm1143, %v1070
  %1200 = vst.msk [vmem:[%s3 + $0xe0] sm:$0xf] %vm1143, %v1071
  %1201 = vst.msk [vmem:[%s3 + $0xe4] sm:$0xf] %vm1143, %v1072
  %1202 = vst.msk [vmem:[%s3 + $0xe8] sm:$0xf] %vm1143, %v1073
  %1203 = vst.msk [vmem:[%s3 + $0xec] sm:$0xf] %vm1143, %v1074
  %1204 = vst.msk [vmem:[%s3 + $0xf0] sm:$0xf] %vm1143, %v1075
  %1205 = vst.msk [vmem:[%s3 + $0xf4] sm:$0xf] %vm1143, %v1076
  %1206 = vst.msk [vmem:[%s3 + $0xf8] sm:$0xf] %vm1143, %v1077
  %1207 = vst.msk [vmem:[%s3 + $0xfc] sm:$0xf] %vm1143, %v1078
  // Predicated region
  $region14: #{_stem.2} parent=0 // pred_check
    _
  $region15: #{_stem.2} parent=0 // pred_check_branch
    %1209 = sbr.rel (0) target = $region17
  $region16: #{_stem.2} parent=0 // pred_region
    _
  $region17: #{_stem.2} parent=0 // pred_fallthru
    _
  // Predicated region
  $region18: #{_stem.2} parent=0 // pred_check
    _
  $region19: #{_stem.2} parent=0 // pred_check_branch
    %1211 = sbr.rel (0) target = $region21
  $region20: #{_stem.2} parent=0 // pred_region
    _
  $region21: #{_stem.2} parent=0 // pred_fallthru
    _

// kernel: _stem.3
$region0: #{_stem.3}
  #allocation0 [shape = 'u32[]', space=smem, size = 0x4, offset = 0x4, fixed_abs, tag = 'smem constant byte address 0x4 - core index']
  #allocation1 [shape = 'u32[144,128]{1,0:T(1,128)}', space=vmem, size = 0x12000, scoped, tag = 'internal scratch']
  %s0 = inlined_call_operand.vmem [shape: bf16[2,18,18,64], index: 0, kind: input, shape index: {}]
  %s1 = inlined_call_operand.vmem [shape: bf16[2,16,16,64], index: 1, kind: output, shape index: {}]
  %s2 = sld [smem:[#allocation0]]
  $region37: #{_stem.3} parent=0
    _
  %s4 = ssub.s32 1, %s2
  %s5 = scalar_select 0, %s4, %s2
  loop: start=0, step=1, limit=4
  $region2: #{_stem.3} parent=0 // loop_pre_header
    _
  $region3: #{_stem.3} parent=0 // loop_header
    %s7 = sphi 0, %s11
    %p8 = scmp.ge.s32.totalorder %s7, 4
    %s17 = sphi 0, %s19
    %s20 = sphi 0, %s17
    %s21 = sphi 0, %s20
    %s37 = sphi 0, %s21
    %s43 = sphi 0, %s45
    %s46 = sphi 0, %s43
    %s47 = sphi 0, %s46
    %s63 = sphi 0, %s47
  $region4: #{_stem.3} parent=0 // loop_header_branch
    %10 = sbr.rel (%p8) target = $region8
  $region5: #{_stem.3} parent=0 // loop_body
    %s12 = ssub.s32 %s7, 1
    %s13 = ssub.s32 %s7, 2
    %s14 = sadd.s32 %s7, 1
    %s15 = ssub.s32 %s7, %s14
    %p16 = scmp.eq.s32.totalorder %s15, 0
    %s18 = sadd.s32 %s17, 1
    %s19 = scalar_select %p16, %s17, %s18
    %p22 = pneg %p16
    %p23 = scmp.eq.s32.totalorder %s7, 1
    %p24 = por %p22, %p23
    %p25 = scmp.ne.s32.totalorder %s17, %s20
    %p26 = scmp.eq.s32.totalorder %s7, 0
    %p27 = por %p25, %p26
    %p28 = scmp.ne.s32.totalorder %s17, %s20
    %p29 = scmp.eq.s32.totalorder %s12, 1
    %p30 = por %p28, %p29
    %p31 = scmp.ne.s32.totalorder %s20, %s21
    %p32 = scmp.eq.s32.totalorder %s12, 0
    %p33 = por %p31, %p32
    %p34 = scmp.ne.s32.totalorder %s20, %s21
    %p35 = scmp.eq.s32.totalorder %s13, 1
    %p36 = por %p34, %p35
    %p38 = scmp.ne.s32.totalorder %s21, %s37
    %p39 = scmp.eq.s32.totalorder %s13, 0
    %p40 = por %p38, %p39
    %s41 = ssub.s32 %s7, %s14
    %p42 = scmp.eq.s32.totalorder %s41, 0
    %s44 = sadd.s32 %s43, 1
    %s45 = scalar_select %p42, %s43, %s44
    %p48 = pneg %p42
    %p49 = scmp.eq.s32.totalorder %s7, 1
    %p50 = por %p48, %p49
    %p51 = scmp.ne.s32.totalorder %s43, %s46
    %p52 = scmp.eq.s32.totalorder %s7, 0
    %p53 = por %p51, %p52
    %p54 = scmp.ne.s32.totalorder %s43, %s46
    %p55 = scmp.eq.s32.totalorder %s12, 1
    %p56 = por %p54, %p55
    %p57 = scmp.ne.s32.totalorder %s46, %s47
    %p58 = scmp.eq.s32.totalorder %s12, 0
    %p59 = por %p57, %p58
    %p60 = scmp.ne.s32.totalorder %s46, %s47
    %p61 = scmp.eq.s32.totalorder %s13, 1
    %p62 = por %p60, %p61
    %p64 = scmp.ne.s32.totalorder %s47, %s63
    %p65 = scmp.eq.s32.totalorder %s13, 0
    %p66 = por %p64, %p65
    %p67 = scmp.le.s32.totalorder 1, %s7
    %p68 = scmp.lt.s32.totalorder %s7, 3
    %p69 = pnand %p67, %p68
    %p70 = pneg %p69
    // Predicated region
    $region9: #{_stem.3} parent=5 // pred_check
      _
    $region10: #{_stem.3} parent=5 // pred_check_branch
      %72 = sbr.rel (%p69) target = $region12
    $region11: #{_stem.3} parent=5 // pred_region
      %s73 = ssub.s32 %s7, 1
    $region12: #{_stem.3} parent=5 // pred_fallthru
      _
    %p74 = scmp.lt.s32.totalorder %s7, 2
    // Predicated region
    $region13: #{_stem.3} parent=5 // pred_check
      %p75 = pneg %p74
    $region14: #{_stem.3} parent=5 // pred_check_branch
      %77 = sbr.rel (%p75) target = $region16
    $region15: #{_stem.3} parent=5 // pred_region
      // Predicated region
      $region17: #{_stem.3} parent=15 // pred_check
        %p78 = pneg %p27
      $region18: #{_stem.3} parent=15 // pred_check_branch
        %80 = sbr.rel (%p78) target = $region20
      $region19: #{_stem.3} parent=15 // pred_region
        %p81 = scmp.lt.s32.totalorder %s7, 1
        %s82 = scalar_select %p81, %s7, 1
        %s83 = smul.addr %s82, 54
        %s84 = smul.addr %s83, 4
        %s85 = scalar_lea.vmem %s0, %s84
      $region20: #{_stem.3} parent=15 // pred_fallthru
        _
    $region16: #{_stem.3} parent=5 // pred_fallthru
      _
    %p86 = scmp.le.s32.totalorder 1, %s7
    %p87 = scmp.lt.s32.totalorder %s7, 3
    %p88 = pnand %p86, %p87
    %p89 = pneg %p88
    // Predicated region
    $region21: #{_stem.3} parent=5 // pred_check
      _
    $region22: #{_stem.3} parent=5 // pred_check_branch
      %91 = sbr.rel (%p88) target = $region24
    $region23: #{_stem.3} parent=5 // pred_region
      %s92 = ssub.s32 %s7, 1
      %p93 = scmp.lt.s32.totalorder %s12, 1
      %s94 = scalar_select %p93, %s12, 1
      %s95 = smul.addr %s94, 54
      %s96 = smul.addr %s95, 4
      %s97 = scalar_lea.vmem %s0, %s96
      %p98 = pneg %p33
      %p99 = pneg %p30
      %p100 = pneg %p59
      %p101 = pneg %p56
      %p102 = scmp.lt.s32.totalorder %s12, 1
      %s103 = scalar_select %p102, %s12, 1
      %s104 = smul.addr %s103, 32
      %s105 = smul.addr %s104, 4
      %s106 = scalar_lea.vmem %s1, %s105
      %p107 = scmp.lt.s32.totalorder %s12, 1
      %s108 = scalar_select %p107, %s12, 1
      %s109 = smul.addr %s108, 54
      %s110 = smul.addr %s109, 4
      %s111 = scalar_lea.vmem %s0, %s110
      %p112 = scmp.lt.s32.totalorder %s12, 1
      %s113 = scalar_select %p112, %s12, 1
      %s114 = smul.addr %s113, 32
      %s115 = smul.addr %s114, 4
      %s116 = scalar_lea.vmem %s1, %s115
      %v117 = vld [vmem:[%s111] sm:$0xf]
      %v118 = vld [vmem:[%s111 + $0x4] sm:$0xf]
      %v119 = vld [vmem:[%s111 + $0xc] sm:$0xf]
      %v120 = vld [vmem:[%s111 + $0x10] sm:$0xf]
      %v121 = vld [vmem:[%s111 + $0x18] sm:$0xf]
      %v122 = vld [vmem:[%s111 + $0x1c] sm:$0xf]
      %v123 = vld [vmem:[%s111 + $0x24] sm:$0xf]
      %v124 = vld [vmem:[%s111 + $0x28] sm:$0xf]
      %v125 = vld [vmem:[%s111 + $0x30] sm:$0xf]
      %v126 = vld [vmem:[%s111 + $0x34] sm:$0xf]
      %v127 = vld [vmem:[%s111 + $0x3c] sm:$0xf]
      %v128 = vld [vmem:[%s111 + $0x40] sm:$0xf]
      %v129 = vld [vmem:[%s111 + $0x48] sm:$0xf]
      %v130 = vld [vmem:[%s111 + $0x4c] sm:$0xf]
      %v131 = vld [vmem:[%s111 + $0x54] sm:$0xf]
      %v132 = vld [vmem:[%s111 + $0x58] sm:$0xf]
      %v133 = vld [vmem:[%s111 + $0x60] sm:$0xf]
      %v134 = vld [vmem:[%s111 + $0x64] sm:$0xf]
      %v135 = vld [vmem:[%s111 + $0x6c] sm:$0xf]
      %v136 = vld [vmem:[%s111 + $0x70] sm:$0xf]
      %v137 = vld [vmem:[%s111 + $0x78] sm:$0xf]
      %v138 = vld [vmem:[%s111 + $0x7c] sm:$0xf]
      %v139 = vld [vmem:[%s111 + $0x84] sm:$0xf]
      %v140 = vld [vmem:[%s111 + $0x88] sm:$0xf]
      %v141 = vld [vmem:[%s111 + $0x90] sm:$0xf]
      %v142 = vld [vmem:[%s111 + $0x94] sm:$0xf]
      %v143 = vld [vmem:[%s111 + $0x9c] sm:$0xf]
      %v144 = vld [vmem:[%s111 + $0xa0] sm:$0xf]
      %v145 = vld [vmem:[%s111 + $0xa8] sm:$0xf]
      %v146 = vld [vmem:[%s111 + $0xac] sm:$0xf]
      %v147 = vld [vmem:[%s111 + $0xb4] sm:$0xf]
      %v148 = vld [vmem:[%s111 + $0xb8] sm:$0xf]
      %v149 = vld [vmem:[%s111 + $0x8] sm:$0x1]
      %v150 = vld [vmem:[%s111 + $0x14] sm:$0x1]
      %v151 = vld [vmem:[%s111 + $0x20] sm:$0x1]
      %v152 = vld [vmem:[%s111 + $0x2c] sm:$0x1]
      %v153 = vld [vmem:[%s111 + $0x38] sm:$0x1]
      %v154 = vld [vmem:[%s111 + $0x44] sm:$0x1]
      %v155 = vld [vmem:[%s111 + $0x50] sm:$0x1]
      %v156 = vld [vmem:[%s111 + $0x5c] sm:$0x1]
      %v157 = vld [vmem:[%s111 + $0x68] sm:$0x1]
      %v158 = vld [vmem:[%s111 + $0x74] sm:$0x1]
      %v159 = vld [vmem:[%s111 + $0x80] sm:$0x1]
      %v160 = vld [vmem:[%s111 + $0x8c] sm:$0x1]
      %v161 = vld [vmem:[%s111 + $0x98] sm:$0x1]
      %v162 = vld [vmem:[%s111 + $0xa4] sm:$0x1]
      %v163 = vld [vmem:[%s111 + $0xb0] sm:$0x1]
      %v164 = vld [vmem:[%s111 + $0xbc] sm:$0x1]
      %vm165 = vsmask.f32 3328
      %vm166 = vsmask.f32 7440
      %vm167 = vmor %vm165, %vm166
      %v169 = vshrl.u32 %v117, 16
      %v171 = vrot.slane %v169, 4
      %v172 = vshll.u32 %v117, 16
      %v174 = vrot.slane %v172, 5
      %v175 = vor.u32 %v171, %v174
      %v176 = vrot.slane %v175, 4
      %v178 = vshll.u32 %v118, 16
      %v180 = vrot.slane %v178, 5
      %v181 = vsel %vm167, %v176, %v180
      %v182 = vshrl.u32 %v118, 16
      %v184 = vrot.slane %v182, 4
      %v185 = vor.u32 %v184, %v180
      %v186 = vrot.slane %v185, 4
      %v188 = vshll.u32 %v149, 16
      %v190 = vrot.slane %v188, 5
      %v191 = vsel %vm167, %v186, %v190
      %v193 = vshrl.u32 %v119, 16
      %v195 = vrot.slane %v193, 4
      %v196 = vshll.u32 %v119, 16
      %v198 = vrot.slane %v196, 5
      %v199 = vor.u32 %v195, %v198
      %v200 = vrot.slane %v199, 4
      %v202 = vshll.u32 %v120, 16
      %v204 = vrot.slane %v202, 5
      %v205 = vsel %vm167, %v200, %v204
      %v206 = vshrl.u32 %v120, 16
      %v208 = vrot.slane %v206, 4
      %v209 = vor.u32 %v208, %v204
      %v210 = vrot.slane %v209, 4
      %v212 = vshll.u32 %v150, 16
      %v214 = vrot.slane %v212, 5
      %v215 = vsel %vm167, %v210, %v214
      %v217 = vshrl.u32 %v121, 16
      %v219 = vrot.slane %v217, 4
      %v220 = vshll.u32 %v121, 16
      %v222 = vrot.slane %v220, 5
      %v223 = vor.u32 %v219, %v222
      %v224 = vrot.slane %v223, 4
      %v226 = vshll.u32 %v122, 16
      %v228 = vrot.slane %v226, 5
      %v229 = vsel %vm167, %v224, %v228
      %v230 = vshrl.u32 %v122, 16
      %v232 = vrot.slane %v230, 4
      %v233 = vor.u32 %v232, %v228
      %v234 = vrot.slane %v233, 4
      %v236 = vshll.u32 %v151, 16
      %v238 = vrot.slane %v236, 5
      %v239 = vsel %vm167, %v234, %v238
      %v241 = vshrl.u32 %v123, 16
      %v243 = vrot.slane %v241, 4
      %v244 = vshll.u32 %v123, 16
      %v246 = vrot.slane %v244, 5
      %v247 = vor.u32 %v243, %v246
      %v248 = vrot.slane %v247, 4
      %v250 = vshll.u32 %v124, 16
      %v252 = vrot.slane %v250, 5
      %v253 = vsel %vm167, %v248, %v252
      %v254 = vshrl.u32 %v124, 16
      %v256 = vrot.slane %v254, 4
      %v257 = vor.u32 %v256, %v252
      %v258 = vrot.slane %v257, 4
      %v260 = vshll.u32 %v152, 16
      %v262 = vrot.slane %v260, 5
      %v263 = vsel %vm167, %v258, %v262
      %v265 = vshrl.u32 %v125, 16
      %v267 = vrot.slane %v265, 4
      %v268 = vshll.u32 %v125, 16
      %v270 = vrot.slane %v268, 5
      %v271 = vor.u32 %v267, %v270
      %v272 = vrot.slane %v271, 4
      %v274 = vshll.u32 %v126, 16
      %v276 = vrot.slane %v274, 5
      %v277 = vsel %vm167, %v272, %v276
      %v278 = vshrl.u32 %v126, 16
      %v280 = vrot.slane %v278, 4
      %v281 = vor.u32 %v280, %v276
      %v282 = vrot.slane %v281, 4
      %v284 = vshll.u32 %v153, 16
      %v286 = vrot.slane %v284, 5
      %v287 = vsel %vm167, %v282, %v286
      %v289 = vshrl.u32 %v127, 16
      %v291 = vrot.slane %v289, 4
      %v292 = vshll.u32 %v127, 16
      %v294 = vrot.slane %v292, 5
      %v295 = vor.u32 %v291, %v294
      %v296 = vrot.slane %v295, 4
      %v298 = vshll.u32 %v128, 16
      %v300 = vrot.slane %v298, 5
      %v301 = vsel %vm167, %v296, %v300
      %v302 = vshrl.u32 %v128, 16
      %v304 = vrot.slane %v302, 4
      %v305 = vor.u32 %v304, %v300
      %v306 = vrot.slane %v305, 4
      %v308 = vshll.u32 %v154, 16
      %v310 = vrot.slane %v308, 5
      %v311 = vsel %vm167, %v306, %v310
      %v313 = vshrl.u32 %v129, 16
      %v315 = vrot.slane %v313, 4
      %v316 = vshll.u32 %v129, 16
      %v318 = vrot.slane %v316, 5
      %v319 = vor.u32 %v315, %v318
      %v320 = vrot.slane %v319, 4
      %v322 = vshll.u32 %v130, 16
      %v324 = vrot.slane %v322, 5
      %v325 = vsel %vm167, %v320, %v324
      %v326 = vshrl.u32 %v130, 16
      %v328 = vrot.slane %v326, 4
      %v329 = vor.u32 %v328, %v324
      %v330 = vrot.slane %v329, 4
      %v332 = vshll.u32 %v155, 16
      %v334 = vrot.slane %v332, 5
      %v335 = vsel %vm167, %v330, %v334
      %v337 = vshrl.u32 %v131, 16
      %v339 = vrot.slane %v337, 4
      %v340 = vshll.u32 %v131, 16
      %v342 = vrot.slane %v340, 5
      %v343 = vor.u32 %v339, %v342
      %v344 = vrot.slane %v343, 4
      %v346 = vshll.u32 %v132, 16
      %v348 = vrot.slane %v346, 5
      %v349 = vsel %vm167, %v344, %v348
      %v350 = vshrl.u32 %v132, 16
      %v352 = vrot.slane %v350, 4
      %v353 = vor.u32 %v352, %v348
      %v354 = vrot.slane %v353, 4
      %v356 = vshll.u32 %v156, 16
      %v358 = vrot.slane %v356, 5
      %v359 = vsel %vm167, %v354, %v358
      %v361 = vshrl.u32 %v133, 16
      %v363 = vrot.slane %v361, 4
      %v364 = vshll.u32 %v133, 16
      %v366 = vrot.slane %v364, 5
      %v367 = vor.u32 %v363, %v366
      %v368 = vrot.slane %v367, 4
      %v370 = vshll.u32 %v134, 16
      %v372 = vrot.slane %v370, 5
      %v373 = vsel %vm167, %v368, %v372
      %v374 = vshrl.u32 %v134, 16
      %v376 = vrot.slane %v374, 4
      %v377 = vor.u32 %v376, %v372
      %v378 = vrot.slane %v377, 4
      %v380 = vshll.u32 %v157, 16
      %v382 = vrot.slane %v380, 5
      %v383 = vsel %vm167, %v378, %v382
      %v385 = vshrl.u32 %v135, 16
      %v387 = vrot.slane %v385, 4
      %v388 = vshll.u32 %v135, 16
      %v390 = vrot.slane %v388, 5
      %v391 = vor.u32 %v387, %v390
      %v392 = vrot.slane %v391, 4
      %v394 = vshll.u32 %v136, 16
      %v396 = vrot.slane %v394, 5
      %v397 = vsel %vm167, %v392, %v396
      %v398 = vshrl.u32 %v136, 16
      %v400 = vrot.slane %v398, 4
      %v401 = vor.u32 %v400, %v396
      %v402 = vrot.slane %v401, 4
      %v404 = vshll.u32 %v158, 16
      %v406 = vrot.slane %v404, 5
      %v407 = vsel %vm167, %v402, %v406
      %v409 = vshrl.u32 %v137, 16
      %v411 = vrot.slane %v409, 4
      %v412 = vshll.u32 %v137, 16
      %v414 = vrot.slane %v412, 5
      %v415 = vor.u32 %v411, %v414
      %v416 = vrot.slane %v415, 4
      %v418 = vshll.u32 %v138, 16
      %v420 = vrot.slane %v418, 5
      %v421 = vsel %vm167, %v416, %v420
      %v422 = vshrl.u32 %v138, 16
      %v424 = vrot.slane %v422, 4
      %v425 = vor.u32 %v424, %v420
      %v426 = vrot.slane %v425, 4
      %v428 = vshll.u32 %v159, 16
      %v430 = vrot.slane %v428, 5
      %v431 = vsel %vm167, %v426, %v430
      %v433 = vshrl.u32 %v139, 16
      %v435 = vrot.slane %v433, 4
      %v436 = vshll.u32 %v139, 16
      %v438 = vrot.slane %v436, 5
      %v439 = vor.u32 %v435, %v438
      %v440 = vrot.slane %v439, 4
      %v442 = vshll.u32 %v140, 16
      %v444 = vrot.slane %v442, 5
      %v445 = vsel %vm167, %v440, %v444
      %v446 = vshrl.u32 %v140, 16
      %v448 = vrot.slane %v446, 4
      %v449 = vor.u32 %v448, %v444
      %v450 = vrot.slane %v449, 4
      %v452 = vshll.u32 %v160, 16
      %v454 = vrot.slane %v452, 5
      %v455 = vsel %vm167, %v450, %v454
      %v457 = vshrl.u32 %v141, 16
      %v459 = vrot.slane %v457, 4
      %v460 = vshll.u32 %v141, 16
      %v462 = vrot.slane %v460, 5
      %v463 = vor.u32 %v459, %v462
      %v464 = vrot.slane %v463, 4
      %v466 = vshll.u32 %v142, 16
      %v468 = vrot.slane %v466, 5
      %v469 = vsel %vm167, %v464, %v468
      %v470 = vshrl.u32 %v142, 16
      %v472 = vrot.slane %v470, 4
      %v473 = vor.u32 %v472, %v468
      %v474 = vrot.slane %v473, 4
      %v476 = vshll.u32 %v161, 16
      %v478 = vrot.slane %v476, 5
      %v479 = vsel %vm167, %v474, %v478
      %v481 = vshrl.u32 %v143, 16
      %v483 = vrot.slane %v481, 4
      %v484 = vshll.u32 %v143, 16
      %v486 = vrot.slane %v484, 5
      %v487 = vor.u32 %v483, %v486
      %v488 = vrot.slane %v487, 4
      %v490 = vshll.u32 %v144, 16
      %v492 = vrot.slane %v490, 5
      %v493 = vsel %vm167, %v488, %v492
      %v494 = vshrl.u32 %v144, 16
      %v496 = vrot.slane %v494, 4
      %v497 = vor.u32 %v496, %v492
      %v498 = vrot.slane %v497, 4
      %v500 = vshll.u32 %v162, 16
      %v502 = vrot.slane %v500, 5
      %v503 = vsel %vm167, %v498, %v502
      %v505 = vshrl.u32 %v145, 16
      %v507 = vrot.slane %v505, 4
      %v508 = vshll.u32 %v145, 16
      %v510 = vrot.slane %v508, 5
      %v511 = vor.u32 %v507, %v510
      %v512 = vrot.slane %v511, 4
      %v514 = vshll.u32 %v146, 16
      %v516 = vrot.slane %v514, 5
      %v517 = vsel %vm167, %v512, %v516
      %v518 = vshrl.u32 %v146, 16
      %v520 = vrot.slane %v518, 4
      %v521 = vor.u32 %v520, %v516
      %v522 = vrot.slane %v521, 4
      %v524 = vshll.u32 %v163, 16
      %v526 = vrot.slane %v524, 5
      %v527 = vsel %vm167, %v522, %v526
      %v529 = vshrl.u32 %v147, 16
      %v531 = vrot.slane %v529, 4
      %v532 = vshll.u32 %v147, 16
      %v534 = vrot.slane %v532, 5
      %v535 = vor.u32 %v531, %v534
      %v536 = vrot.slane %v535, 4
      %v538 = vshll.u32 %v148, 16
      %v540 = vrot.slane %v538, 5
      %v541 = vsel %vm167, %v536, %v540
      %v542 = vshrl.u32 %v148, 16
      %v544 = vrot.slane %v542, 4
      %v545 = vor.u32 %v544, %v540
      %v546 = vrot.slane %v545, 4
      %v548 = vshll.u32 %v164, 16
      %v550 = vrot.slane %v548, 5
      %v551 = vsel %vm167, %v546, %v550
      %v584 = vmax.bf16 %v117, %v181
      %v585 = vmax.bf16 %v118, %v191
      %v586 = vmax.bf16 %v119, %v205
      %v587 = vmax.bf16 %v120, %v215
      %v588 = vmax.bf16 %v121, %v229
      %v589 = vmax.bf16 %v122, %v239
      %v590 = vmax.bf16 %v123, %v253
      %v591 = vmax.bf16 %v124, %v263
      %v592 = vmax.bf16 %v125, %v277
      %v593 = vmax.bf16 %v126, %v287
      %v594 = vmax.bf16 %v127, %v301
      %v595 = vmax.bf16 %v128, %v311
      %v596 = vmax.bf16 %v129, %v325
      %v597 = vmax.bf16 %v130, %v335
      %v598 = vmax.bf16 %v131, %v349
      %v599 = vmax.bf16 %v132, %v359
      %v600 = vmax.bf16 %v133, %v373
      %v601 = vmax.bf16 %v134, %v383
      %v602 = vmax.bf16 %v135, %v397
      %v603 = vmax.bf16 %v136, %v407
      %v604 = vmax.bf16 %v137, %v421
      %v605 = vmax.bf16 %v138, %v431
      %v606 = vmax.bf16 %v139, %v445
      %v607 = vmax.bf16 %v140, %v455
      %v608 = vmax.bf16 %v141, %v469
      %v609 = vmax.bf16 %v142, %v479
      %v610 = vmax.bf16 %v143, %v493
      %v611 = vmax.bf16 %v144, %v503
      %v612 = vmax.bf16 %v145, %v517
      %v613 = vmax.bf16 %v146, %v527
      %v614 = vmax.bf16 %v147, %v541
      %v615 = vmax.bf16 %v148, %v551
      %v616 = vld [vmem:[%s111] sm:$0xe]
      %v617 = vld [vmem:[%s111 + $0xc] sm:$0xe]
      %v618 = vld [vmem:[%s111 + $0x18] sm:$0xe]
      %v619 = vld [vmem:[%s111 + $0x24] sm:$0xe]
      %v620 = vld [vmem:[%s111 + $0x30] sm:$0xe]
      %v621 = vld [vmem:[%s111 + $0x3c] sm:$0xe]
      %v622 = vld [vmem:[%s111 + $0x48] sm:$0xe]
      %v623 = vld [vmem:[%s111 + $0x54] sm:$0xe]
      %v624 = vld [vmem:[%s111 + $0x60] sm:$0xe]
      %v625 = vld [vmem:[%s111 + $0x6c] sm:$0xe]
      %v626 = vld [vmem:[%s111 + $0x78] sm:$0xe]
      %v627 = vld [vmem:[%s111 + $0x84] sm:$0xe]
      %v628 = vld [vmem:[%s111 + $0x90] sm:$0xe]
      %v629 = vld [vmem:[%s111 + $0x9c] sm:$0xe]
      %v630 = vld [vmem:[%s111 + $0xa8] sm:$0xe]
      %v631 = vld [vmem:[%s111 + $0xb4] sm:$0xe]
      %vm680 = vcmask 1042432
      %vm681 = vcmask 1046532
      %vm682 = vmor %vm680, %vm681
      %v683 = vrot.slane %v616, 5
      %v684 = vrot.slane %v683, 4
      %v685 = vrot.slane %v118, 5
      %v686 = vsel %vm682, %v684, %v685
      %v687 = vrot.slane %v685, 4
      %v688 = vrot.slane %v149, 5
      %v689 = vsel %vm682, %v687, %v688
      %v690 = vrot.slane %v617, 5
      %v691 = vrot.slane %v690, 4
      %v692 = vrot.slane %v120, 5
      %v693 = vsel %vm682, %v691, %v692
      %v694 = vrot.slane %v692, 4
      %v695 = vrot.slane %v150, 5
      %v696 = vsel %vm682, %v694, %v695
      %v697 = vrot.slane %v618, 5
      %v698 = vrot.slane %v697, 4
      %v699 = vrot.slane %v122, 5
      %v700 = vsel %vm682, %v698, %v699
      %v701 = vrot.slane %v699, 4
      %v702 = vrot.slane %v151, 5
      %v703 = vsel %vm682, %v701, %v702
      %v704 = vrot.slane %v619, 5
      %v705 = vrot.slane %v704, 4
      %v706 = vrot.slane %v124, 5
      %v707 = vsel %vm682, %v705, %v706
      %v708 = vrot.slane %v706, 4
      %v709 = vrot.slane %v152, 5
      %v710 = vsel %vm682, %v708, %v709
      %v711 = vrot.slane %v620, 5
      %v712 = vrot.slane %v711, 4
      %v713 = vrot.slane %v126, 5
      %v714 = vsel %vm682, %v712, %v713
      %v715 = vrot.slane %v713, 4
      %v716 = vrot.slane %v153, 5
      %v717 = vsel %vm682, %v715, %v716
      %v718 = vrot.slane %v621, 5
      %v719 = vrot.slane %v718, 4
      %v720 = vrot.slane %v128, 5
      %v721 = vsel %vm682, %v719, %v720
      %v722 = vrot.slane %v720, 4
      %v723 = vrot.slane %v154, 5
      %v724 = vsel %vm682, %v722, %v723
      %v725 = vrot.slane %v622, 5
      %v726 = vrot.slane %v725, 4
      %v727 = vrot.slane %v130, 5
      %v728 = vsel %vm682, %v726, %v727
      %v729 = vrot.slane %v727, 4
      %v730 = vrot.slane %v155, 5
      %v731 = vsel %vm682, %v729, %v730
      %v732 = vrot.slane %v623, 5
      %v733 = vrot.slane %v732, 4
      %v734 = vrot.slane %v132, 5
      %v735 = vsel %vm682, %v733, %v734
      %v736 = vrot.slane %v734, 4
      %v737 = vrot.slane %v156, 5
      %v738 = vsel %vm682, %v736, %v737
      %v739 = vrot.slane %v624, 5
      %v740 = vrot.slane %v739, 4
      %v741 = vrot.slane %v134, 5
      %v742 = vsel %vm682, %v740, %v741
      %v743 = vrot.slane %v741, 4
      %v744 = vrot.slane %v157, 5
      %v745 = vsel %vm682, %v743, %v744
      %v746 = vrot.slane %v625, 5
      %v747 = vrot.slane %v746, 4
      %v748 = vrot.slane %v136, 5
      %v749 = vsel %vm682, %v747, %v748
      %v750 = vrot.slane %v748, 4
      %v751 = vrot.slane %v158, 5
      %v752 = vsel %vm682, %v750, %v751
      %v753 = vrot.slane %v626, 5
      %v754 = vrot.slane %v753, 4
      %v755 = vrot.slane %v138, 5
      %v756 = vsel %vm682, %v754, %v755
      %v757 = vrot.slane %v755, 4
      %v758 = vrot.slane %v159, 5
      %v759 = vsel %vm682, %v757, %v758
      %v760 = vrot.slane %v627, 5
      %v761 = vrot.slane %v760, 4
      %v762 = vrot.slane %v140, 5
      %v763 = vsel %vm682, %v761, %v762
      %v764 = vrot.slane %v762, 4
      %v765 = vrot.slane %v160, 5
      %v766 = vsel %vm682, %v764, %v765
      %v767 = vrot.slane %v628, 5
      %v768 = vrot.slane %v767, 4
      %v769 = vrot.slane %v142, 5
      %v770 = vsel %vm682, %v768, %v769
      %v771 = vrot.slane %v769, 4
      %v772 = vrot.slane %v161, 5
      %v773 = vsel %vm682, %v771, %v772
      %v774 = vrot.slane %v629, 5
      %v775 = vrot.slane %v774, 4
      %v776 = vrot.slane %v144, 5
      %v777 = vsel %vm682, %v775, %v776
      %v778 = vrot.slane %v776, 4
      %v779 = vrot.slane %v162, 5
      %v780 = vsel %vm682, %v778, %v779
      %v781 = vrot.slane %v630, 5
      %v782 = vrot.slane %v781, 4
      %v783 = vrot.slane %v146, 5
      %v784 = vsel %vm682, %v782, %v783
      %v785 = vrot.slane %v783, 4
      %v786 = vrot.slane %v163, 5
      %v787 = vsel %vm682, %v785, %v786
      %v788 = vrot.slane %v631, 5
      %v789 = vrot.slane %v788, 4
      %v790 = vrot.slane %v148, 5
      %v791 = vsel %vm682, %v789, %v790
      %v792 = vrot.slane %v790, 4
      %v793 = vrot.slane %v164, 5
      %v794 = vsel %vm682, %v792, %v793
      %v827 = vmax.bf16 %v584, %v686
      %v828 = vmax.bf16 %v585, %v689
      %v829 = vmax.bf16 %v586, %v693
      %v830 = vmax.bf16 %v587, %v696
      %v831 = vmax.bf16 %v588, %v700
      %v832 = vmax.bf16 %v589, %v703
      %v833 = vmax.bf16 %v590, %v707
      %v834 = vmax.bf16 %v591, %v710
      %v835 = vmax.bf16 %v592, %v714
      %v836 = vmax.bf16 %v593, %v717
      %v837 = vmax.bf16 %v594, %v721
      %v838 = vmax.bf16 %v595, %v724
      %v839 = vmax.bf16 %v596, %v728
      %v840 = vmax.bf16 %v597, %v731
      %v841 = vmax.bf16 %v598, %v735
      %v842 = vmax.bf16 %v599, %v738
      %v843 = vmax.bf16 %v600, %v742
      %v844 = vmax.bf16 %v601, %v745
      %v845 = vmax.bf16 %v602, %v749
      %v846 = vmax.bf16 %v603, %v752
      %v847 = vmax.bf16 %v604, %v756
      %v848 = vmax.bf16 %v605, %v759
      %v849 = vmax.bf16 %v606, %v763
      %v850 = vmax.bf16 %v607, %v766
      %v851 = vmax.bf16 %v608, %v770
      %v852 = vmax.bf16 %v609, %v773
      %v853 = vmax.bf16 %v610, %v777
      %v854 = vmax.bf16 %v611, %v780
      %v855 = vmax.bf16 %v612, %v784
      %v856 = vmax.bf16 %v613, %v787
      %v857 = vmax.bf16 %v614, %v791
      %v858 = vmax.bf16 %v615, %v794
      %s859 = scalar_lea.vmem %s111, 12
      %v860 = vld [vmem:[%s859] sm:$0xf]
      %v861 = vld [vmem:[%s859 + $0x4] sm:$0xf]
      %v862 = vld [vmem:[%s859 + $0xc] sm:$0xf]
      %v863 = vld [vmem:[%s859 + $0x10] sm:$0xf]
      %v864 = vld [vmem:[%s859 + $0x18] sm:$0xf]
      %v865 = vld [vmem:[%s859 + $0x1c] sm:$0xf]
      %v866 = vld [vmem:[%s859 + $0x24] sm:$0xf]
      %v867 = vld [vmem:[%s859 + $0x28] sm:$0xf]
      %v868 = vld [vmem:[%s859 + $0x30] sm:$0xf]
      %v869 = vld [vmem:[%s859 + $0x34] sm:$0xf]
      %v870 = vld [vmem:[%s859 + $0x3c] sm:$0xf]
      %v871 = vld [vmem:[%s859 + $0x40] sm:$0xf]
      %v872 = vld [vmem:[%s859 + $0x48] sm:$0xf]
      %v873 = vld [vmem:[%s859 + $0x4c] sm:$0xf]
      %v874 = vld [vmem:[%s859 + $0x54] sm:$0xf]
      %v875 = vld [vmem:[%s859 + $0x58] sm:$0xf]
      %v876 = vld [vmem:[%s859 + $0x60] sm:$0xf]
      %v877 = vld [vmem:[%s859 + $0x64] sm:$0xf]
      %v878 = vld [vmem:[%s859 + $0x6c] sm:$0xf]
      %v879 = vld [vmem:[%s859 + $0x70] sm:$0xf]
      %v880 = vld [vmem:[%s859 + $0x78] sm:$0xf]
      %v881 = vld [vmem:[%s859 + $0x7c] sm:$0xf]
      %v882 = vld [vmem:[%s859 + $0x84] sm:$0xf]
      %v883 = vld [vmem:[%s859 + $0x88] sm:$0xf]
      %v884 = vld [vmem:[%s859 + $0x90] sm:$0xf]
      %v885 = vld [vmem:[%s859 + $0x94] sm:$0xf]
      %v886 = vld [vmem:[%s859 + $0x9c] sm:$0xf]
      %v887 = vld [vmem:[%s859 + $0xa0] sm:$0xf]
      %v888 = vld [vmem:[%s859 + $0xa8] sm:$0xf]
      %v889 = vld [vmem:[%s859 + $0xac] sm:$0xf]
      %v890 = vld [vmem:[%s859 + $0xb4] sm:$0xf]
      %v891 = vld [vmem:[%s859 + $0xb8] sm:$0xf]
      %v892 = vmax.bf16 %v827, %v860
      %v893 = vmax.bf16 %v828, %v861
      %v894 = vmax.bf16 %v829, %v862
      %v895 = vmax.bf16 %v830, %v863
      %v896 = vmax.bf16 %v831, %v864
      %v897 = vmax.bf16 %v832, %v865
      %v898 = vmax.bf16 %v833, %v866
      %v899 = vmax.bf16 %v834, %v867
      %v900 = vmax.bf16 %v835, %v868
      %v901 = vmax.bf16 %v836, %v869
      %v902 = vmax.bf16 %v837, %v870
      %v903 = vmax.bf16 %v838, %v871
      %v904 = vmax.bf16 %v839, %v872
      %v905 = vmax.bf16 %v840, %v873
      %v906 = vmax.bf16 %v841, %v874
      %v907 = vmax.bf16 %v842, %v875
      %v908 = vmax.bf16 %v843, %v876
      %v909 = vmax.bf16 %v844, %v877
      %v910 = vmax.bf16 %v845, %v878
      %v911 = vmax.bf16 %v846, %v879
      %v912 = vmax.bf16 %v847, %v880
      %v913 = vmax.bf16 %v848, %v881
      %v914 = vmax.bf16 %v849, %v882
      %v915 = vmax.bf16 %v850, %v883
      %v916 = vmax.bf16 %v851, %v884
      %v917 = vmax.bf16 %v852, %v885
      %v918 = vmax.bf16 %v853, %v886
      %v919 = vmax.bf16 %v854, %v887
      %v920 = vmax.bf16 %v855, %v888
      %v921 = vmax.bf16 %v856, %v889
      %v922 = vmax.bf16 %v857, %v890
      %v923 = vmax.bf16 %v858, %v891
      %v924 = vld [vmem:[%s859 + $0x8] sm:$0x1]
      %v925 = vld [vmem:[%s859 + $0x14] sm:$0x1]
      %v926 = vld [vmem:[%s859 + $0x20] sm:$0x1]
      %v927 = vld [vmem:[%s859 + $0x2c] sm:$0x1]
      %v928 = vld [vmem:[%s859 + $0x38] sm:$0x1]
      %v929 = vld [vmem:[%s859 + $0x44] sm:$0x1]
      %v930 = vld [vmem:[%s859 + $0x50] sm:$0x1]
      %v931 = vld [vmem:[%s859 + $0x5c] sm:$0x1]
      %v932 = vld [vmem:[%s859 + $0x68] sm:$0x1]
      %v933 = vld [vmem:[%s859 + $0x74] sm:$0x1]
      %v934 = vld [vmem:[%s859 + $0x80] sm:$0x1]
      %v935 = vld [vmem:[%s859 + $0x8c] sm:$0x1]
      %v936 = vld [vmem:[%s859 + $0x98] sm:$0x1]
      %v937 = vld [vmem:[%s859 + $0xa4] sm:$0x1]
      %v938 = vld [vmem:[%s859 + $0xb0] sm:$0x1]
      %v939 = vld [vmem:[%s859 + $0xbc] sm:$0x1]
      %v941 = vshrl.u32 %v860, 16
      %v943 = vrot.slane %v941, 4
      %v944 = vshll.u32 %v860, 16
      %v946 = vrot.slane %v944, 5
      %v947 = vor.u32 %v943, %v946
      %v948 = vrot.slane %v947, 4
      %v950 = vshll.u32 %v861, 16
      %v952 = vrot.slane %v950, 5
      %v953 = vsel %vm167, %v948, %v952
      %v954 = vshrl.u32 %v861, 16
      %v956 = vrot.slane %v954, 4
      %v957 = vor.u32 %v956, %v952
      %v958 = vrot.slane %v957, 4
      %v960 = vshll.u32 %v924, 16
      %v962 = vrot.slane %v960, 5
      %v963 = vsel %vm167, %v958, %v962
      %v965 = vshrl.u32 %v862, 16
      %v967 = vrot.slane %v965, 4
      %v968 = vshll.u32 %v862, 16
      %v970 = vrot.slane %v968, 5
      %v971 = vor.u32 %v967, %v970
      %v972 = vrot.slane %v971, 4
      %v974 = vshll.u32 %v863, 16
      %v976 = vrot.slane %v974, 5
      %v977 = vsel %vm167, %v972, %v976
      %v978 = vshrl.u32 %v863, 16
      %v980 = vrot.slane %v978, 4
      %v981 = vor.u32 %v980, %v976
      %v982 = vrot.slane %v981, 4
      %v984 = vshll.u32 %v925, 16
      %v986 = vrot.slane %v984, 5
      %v987 = vsel %vm167, %v982, %v986
      %v989 = vshrl.u32 %v864, 16
      %v991 = vrot.slane %v989, 4
      %v992 = vshll.u32 %v864, 16
      %v994 = vrot.slane %v992, 5
      %v995 = vor.u32 %v991, %v994
      %v996 = vrot.slane %v995, 4
      %v998 = vshll.u32 %v865, 16
      %v1000 = vrot.slane %v998, 5
      %v1001 = vsel %vm167, %v996, %v1000
      %v1002 = vshrl.u32 %v865, 16
      %v1004 = vrot.slane %v1002, 4
      %v1005 = vor.u32 %v1004, %v1000
      %v1006 = vrot.slane %v1005, 4
      %v1008 = vshll.u32 %v926, 16
      %v1010 = vrot.slane %v1008, 5
      %v1011 = vsel %vm167, %v1006, %v1010
      %v1013 = vshrl.u32 %v866, 16
      %v1015 = vrot.slane %v1013, 4
      %v1016 = vshll.u32 %v866, 16
      %v1018 = vrot.slane %v1016, 5
      %v1019 = vor.u32 %v1015, %v1018
      %v1020 = vrot.slane %v1019, 4
      %v1022 = vshll.u32 %v867, 16
      %v1024 = vrot.slane %v1022, 5
      %v1025 = vsel %vm167, %v1020, %v1024
      %v1026 = vshrl.u32 %v867, 16
      %v1028 = vrot.slane %v1026, 4
      %v1029 = vor.u32 %v1028, %v1024
      %v1030 = vrot.slane %v1029, 4
      %v1032 = vshll.u32 %v927, 16
      %v1034 = vrot.slane %v1032, 5
      %v1035 = vsel %vm167, %v1030, %v1034
      %v1037 = vshrl.u32 %v868, 16
      %v1039 = vrot.slane %v1037, 4
      %v1040 = vshll.u32 %v868, 16
      %v1042 = vrot.slane %v1040, 5
      %v1043 = vor.u32 %v1039, %v1042
      %v1044 = vrot.slane %v1043, 4
      %v1046 = vshll.u32 %v869, 16
      %v1048 = vrot.slane %v1046, 5
      %v1049 = vsel %vm167, %v1044, %v1048
      %v1050 = vshrl.u32 %v869, 16
      %v1052 = vrot.slane %v1050, 4
      %v1053 = vor.u32 %v1052, %v1048
      %v1054 = vrot.slane %v1053, 4
      %v1056 = vshll.u32 %v928, 16
      %v1058 = vrot.slane %v1056, 5
      %v1059 = vsel %vm167, %v1054, %v1058
      %v1061 = vshrl.u32 %v870, 16
      %v1063 = vrot.slane %v1061, 4
      %v1064 = vshll.u32 %v870, 16
      %v1066 = vrot.slane %v1064, 5
      %v1067 = vor.u32 %v1063, %v1066
      %v1068 = vrot.slane %v1067, 4
      %v1070 = vshll.u32 %v871, 16
      %v1072 = vrot.slane %v1070, 5
      %v1073 = vsel %vm167, %v1068, %v1072
      %v1074 = vshrl.u32 %v871, 16
      %v1076 = vrot.slane %v1074, 4
      %v1077 = vor.u32 %v1076, %v1072
      %v1078 = vrot.slane %v1077, 4
      %v1080 = vshll.u32 %v929, 16
      %v1082 = vrot.slane %v1080, 5
      %v1083 = vsel %vm167, %v1078, %v1082
      %v1085 = vshrl.u32 %v872, 16
      %v1087 = vrot.slane %v1085, 4
      %v1088 = vshll.u32 %v872, 16
      %v1090 = vrot.slane %v1088, 5
      %v1091 = vor.u32 %v1087, %v1090
      %v1092 = vrot.slane %v1091, 4
      %v1094 = vshll.u32 %v873, 16
      %v1096 = vrot.slane %v1094, 5
      %v1097 = vsel %vm167, %v1092, %v1096
      %v1098 = vshrl.u32 %v873, 16
      %v1100 = vrot.slane %v1098, 4
      %v1101 = vor.u32 %v1100, %v1096
      %v1102 = vrot.slane %v1101, 4
      %v1104 = vshll.u32 %v930, 16
      %v1106 = vrot.slane %v1104, 5
      %v1107 = vsel %vm167, %v1102, %v1106
      %v1109 = vshrl.u32 %v874, 16
      %v1111 = vrot.slane %v1109, 4
      %v1112 = vshll.u32 %v874, 16
      %v1114 = vrot.slane %v1112, 5
      %v1115 = vor.u32 %v1111, %v1114
      %v1116 = vrot.slane %v1115, 4
      %v1118 = vshll.u32 %v875, 16
      %v1120 = vrot.slane %v1118, 5
      %v1121 = vsel %vm167, %v1116, %v1120
      %v1122 = vshrl.u32 %v875, 16
      %v1124 = vrot.slane %v1122, 4
      %v1125 = vor.u32 %v1124, %v1120
      %v1126 = vrot.slane %v1125, 4
      %v1128 = vshll.u32 %v931, 16
      %v1130 = vrot.slane %v1128, 5
      %v1131 = vsel %vm167, %v1126, %v1130
      %v1133 = vshrl.u32 %v876, 16
      %v1135 = vrot.slane %v1133, 4
      %v1136 = vshll.u32 %v876, 16
      %v1138 = vrot.slane %v1136, 5
      %v1139 = vor.u32 %v1135, %v1138
      %v1140 = vrot.slane %v1139, 4
      %v1142 = vshll.u32 %v877, 16
      %v1144 = vrot.slane %v1142, 5
      %v1145 = vsel %vm167, %v1140, %v1144
      %v1146 = vshrl.u32 %v877, 16
      %v1148 = vrot.slane %v1146, 4
      %v1149 = vor.u32 %v1148, %v1144
      %v1150 = vrot.slane %v1149, 4
      %v1152 = vshll.u32 %v932, 16
      %v1154 = vrot.slane %v1152, 5
      %v1155 = vsel %vm167, %v1150, %v1154
      %v1157 = vshrl.u32 %v878, 16
      %v1159 = vrot.slane %v1157, 4
      %v1160 = vshll.u32 %v878, 16
      %v1162 = vrot.slane %v1160, 5
      %v1163 = vor.u32 %v1159, %v1162
      %v1164 = vrot.slane %v1163, 4
      %v1166 = vshll.u32 %v879, 16
      %v1168 = vrot.slane %v1166, 5
      %v1169 = vsel %vm167, %v1164, %v1168
      %v1170 = vshrl.u32 %v879, 16
      %v1172 = vrot.slane %v1170, 4
      %v1173 = vor.u32 %v1172, %v1168
      %v1174 = vrot.slane %v1173, 4
      %v1176 = vshll.u32 %v933, 16
      %v1178 = vrot.slane %v1176, 5
      %v1179 = vsel %vm167, %v1174, %v1178
      %v1181 = vshrl.u32 %v880, 16
      %v1183 = vrot.slane %v1181, 4
      %v1184 = vshll.u32 %v880, 16
      %v1186 = vrot.slane %v1184, 5
      %v1187 = vor.u32 %v1183, %v1186
      %v1188 = vrot.slane %v1187, 4
      %v1190 = vshll.u32 %v881, 16
      %v1192 = vrot.slane %v1190, 5
      %v1193 = vsel %vm167, %v1188, %v1192
      %v1194 = vshrl.u32 %v881, 16
      %v1196 = vrot.slane %v1194, 4
      %v1197 = vor.u32 %v1196, %v1192
      %v1198 = vrot.slane %v1197, 4
      %v1200 = vshll.u32 %v934, 16
      %v1202 = vrot.slane %v1200, 5
      %v1203 = vsel %vm167, %v1198, %v1202
      %v1205 = vshrl.u32 %v882, 16
      %v1207 = vrot.slane %v1205, 4
      %v1208 = vshll.u32 %v882, 16
      %v1210 = vrot.slane %v1208, 5
      %v1211 = vor.u32 %v1207, %v1210
      %v1212 = vrot.slane %v1211, 4
      %v1214 = vshll.u32 %v883, 16
      %v1216 = vrot.slane %v1214, 5
      %v1217 = vsel %vm167, %v1212, %v1216
      %v1218 = vshrl.u32 %v883, 16
      %v1220 = vrot.slane %v1218, 4
      %v1221 = vor.u32 %v1220, %v1216
      %v1222 = vrot.slane %v1221, 4
      %v1224 = vshll.u32 %v935, 16
      %v1226 = vrot.slane %v1224, 5
      %v1227 = vsel %vm167, %v1222, %v1226
      %v1229 = vshrl.u32 %v884, 16
      %v1231 = vrot.slane %v1229, 4
      %v1232 = vshll.u32 %v884, 16
      %v1234 = vrot.slane %v1232, 5
      %v1235 = vor.u32 %v1231, %v1234
      %v1236 = vrot.slane %v1235, 4
      %v1238 = vshll.u32 %v885, 16
      %v1240 = vrot.slane %v1238, 5
      %v1241 = vsel %vm167, %v1236, %v1240
      %v1242 = vshrl.u32 %v885, 16
      %v1244 = vrot.slane %v1242, 4
      %v1245 = vor.u32 %v1244, %v1240
      %v1246 = vrot.slane %v1245, 4
      %v1248 = vshll.u32 %v936, 16
      %v1250 = vrot.slane %v1248, 5
      %v1251 = vsel %vm167, %v1246, %v1250
      %v1253 = vshrl.u32 %v886, 16
      %v1255 = vrot.slane %v1253, 4
      %v1256 = vshll.u32 %v886, 16
      %v1258 = vrot.slane %v1256, 5
      %v1259 = vor.u32 %v1255, %v1258
      %v1260 = vrot.slane %v1259, 4
      %v1262 = vshll.u32 %v887, 16
      %v1264 = vrot.slane %v1262, 5
      %v1265 = vsel %vm167, %v1260, %v1264
      %v1266 = vshrl.u32 %v887, 16
      %v1268 = vrot.slane %v1266, 4
      %v1269 = vor.u32 %v1268, %v1264
      %v1270 = vrot.slane %v1269, 4
      %v1272 = vshll.u32 %v937, 16
      %v1274 = vrot.slane %v1272, 5
      %v1275 = vsel %vm167, %v1270, %v1274
      %v1277 = vshrl.u32 %v888, 16
      %v1279 = vrot.slane %v1277, 4
      %v1280 = vshll.u32 %v888, 16
      %v1282 = vrot.slane %v1280, 5
      %v1283 = vor.u32 %v1279, %v1282
      %v1284 = vrot.slane %v1283, 4
      %v1286 = vshll.u32 %v889, 16
      %v1288 = vrot.slane %v1286, 5
      %v1289 = vsel %vm167, %v1284, %v1288
      %v1290 = vshrl.u32 %v889, 16
      %v1292 = vrot.slane %v1290, 4
      %v1293 = vor.u32 %v1292, %v1288
      %v1294 = vrot.slane %v1293, 4
      %v1296 = vshll.u32 %v938, 16
      %v1298 = vrot.slane %v1296, 5
      %v1299 = vsel %vm167, %v1294, %v1298
      %v1301 = vshrl.u32 %v890, 16
      %v1303 = vrot.slane %v1301, 4
      %v1304 = vshll.u32 %v890, 16
      %v1306 = vrot.slane %v1304, 5
      %v1307 = vor.u32 %v1303, %v1306
      %v1308 = vrot.slane %v1307, 4
      %v1310 = vshll.u32 %v891, 16
      %v1312 = vrot.slane %v1310, 5
      %v1313 = vsel %vm167, %v1308, %v1312
      %v1314 = vshrl.u32 %v891, 16
      %v1316 = vrot.slane %v1314, 4
      %v1317 = vor.u32 %v1316, %v1312
      %v1318 = vrot.slane %v1317, 4
      %v1320 = vshll.u32 %v939, 16
      %v1322 = vrot.slane %v1320, 5
      %v1323 = vsel %vm167, %v1318, %v1322
      %v1356 = vmax.bf16 %v892, %v953
      %v1357 = vmax.bf16 %v893, %v963
      %v1358 = vmax.bf16 %v894, %v977
      %v1359 = vmax.bf16 %v895, %v987
      %v1360 = vmax.bf16 %v896, %v1001
      %v1361 = vmax.bf16 %v897, %v1011
      %v1362 = vmax.bf16 %v898, %v1025
      %v1363 = vmax.bf16 %v899, %v1035
      %v1364 = vmax.bf16 %v900, %v1049
      %v1365 = vmax.bf16 %v901, %v1059
      %v1366 = vmax.bf16 %v902, %v1073
      %v1367 = vmax.bf16 %v903, %v1083
      %v1368 = vmax.bf16 %v904, %v1097
      %v1369 = vmax.bf16 %v905, %v1107
      %v1370 = vmax.bf16 %v906, %v1121
      %v1371 = vmax.bf16 %v907, %v1131
      %v1372 = vmax.bf16 %v908, %v1145
      %v1373 = vmax.bf16 %v909, %v1155
      %v1374 = vmax.bf16 %v910, %v1169
      %v1375 = vmax.bf16 %v911, %v1179
      %v1376 = vmax.bf16 %v912, %v1193
      %v1377 = vmax.bf16 %v913, %v1203
      %v1378 = vmax.bf16 %v914, %v1217
      %v1379 = vmax.bf16 %v915, %v1227
      %v1380 = vmax.bf16 %v916, %v1241
      %v1381 = vmax.bf16 %v917, %v1251
      %v1382 = vmax.bf16 %v918, %v1265
      %v1383 = vmax.bf16 %v919, %v1275
      %v1384 = vmax.bf16 %v920, %v1289
      %v1385 = vmax.bf16 %v921, %v1299
      %v1386 = vmax.bf16 %v922, %v1313
      %v1387 = vmax.bf16 %v923, %v1323
      %v1388 = vld [vmem:[%s859] sm:$0xe]
      %v1389 = vld [vmem:[%s859 + $0xc] sm:$0xe]
      %v1390 = vld [vmem:[%s859 + $0x18] sm:$0xe]
      %v1391 = vld [vmem:[%s859 + $0x24] sm:$0xe]
      %v1392 = vld [vmem:[%s859 + $0x30] sm:$0xe]
      %v1393 = vld [vmem:[%s859 + $0x3c] sm:$0xe]
      %v1394 = vld [vmem:[%s859 + $0x48] sm:$0xe]
      %v1395 = vld [vmem:[%s859 + $0x54] sm:$0xe]
      %v1396 = vld [vmem:[%s859 + $0x60] sm:$0xe]
      %v1397 = vld [vmem:[%s859 + $0x6c] sm:$0xe]
      %v1398 = vld [vmem:[%s859 + $0x78] sm:$0xe]
      %v1399 = vld [vmem:[%s859 + $0x84] sm:$0xe]
      %v1400 = vld [vmem:[%s859 + $0x90] sm:$0xe]
      %v1401 = vld [vmem:[%s859 + $0x9c] sm:$0xe]
      %v1402 = vld [vmem:[%s859 + $0xa8] sm:$0xe]
      %v1403 = vld [vmem:[%s859 + $0xb4] sm:$0xe]
      %v1452 = vrot.slane %v1388, 5
      %v1453 = vrot.slane %v1452, 4
      %v1454 = vrot.slane %v861, 5
      %v1455 = vsel %vm682, %v1453, %v1454
      %v1456 = vrot.slane %v1454, 4
      %v1457 = vrot.slane %v924, 5
      %v1458 = vsel %vm682, %v1456, %v1457
      %v1459 = vrot.slane %v1389, 5
      %v1460 = vrot.slane %v1459, 4
      %v1461 = vrot.slane %v863, 5
      %v1462 = vsel %vm682, %v1460, %v1461
      %v1463 = vrot.slane %v1461, 4
      %v1464 = vrot.slane %v925, 5
      %v1465 = vsel %vm682, %v1463, %v1464
      %v1466 = vrot.slane %v1390, 5
      %v1467 = vrot.slane %v1466, 4
      %v1468 = vrot.slane %v865, 5
      %v1469 = vsel %vm682, %v1467, %v1468
      %v1470 = vrot.slane %v1468, 4
      %v1471 = vrot.slane %v926, 5
      %v1472 = vsel %vm682, %v1470, %v1471
      %v1473 = vrot.slane %v1391, 5
      %v1474 = vrot.slane %v1473, 4
      %v1475 = vrot.slane %v867, 5
      %v1476 = vsel %vm682, %v1474, %v1475
      %v1477 = vrot.slane %v1475, 4
      %v1478 = vrot.slane %v927, 5
      %v1479 = vsel %vm682, %v1477, %v1478
      %v1480 = vrot.slane %v1392, 5
      %v1481 = vrot.slane %v1480, 4
      %v1482 = vrot.slane %v869, 5
      %v1483 = vsel %vm682, %v1481, %v1482
      %v1484 = vrot.slane %v1482, 4
      %v1485 = vrot.slane %v928, 5
      %v1486 = vsel %vm682, %v1484, %v1485
      %v1487 = vrot.slane %v1393, 5
      %v1488 = vrot.slane %v1487, 4
      %v1489 = vrot.slane %v871, 5
      %v1490 = vsel %vm682, %v1488, %v1489
      %v1491 = vrot.slane %v1489, 4
      %v1492 = vrot.slane %v929, 5
      %v1493 = vsel %vm682, %v1491, %v1492
      %v1494 = vrot.slane %v1394, 5
      %v1495 = vrot.slane %v1494, 4
      %v1496 = vrot.slane %v873, 5
      %v1497 = vsel %vm682, %v1495, %v1496
      %v1498 = vrot.slane %v1496, 4
      %v1499 = vrot.slane %v930, 5
      %v1500 = vsel %vm682, %v1498, %v1499
      %v1501 = vrot.slane %v1395, 5
      %v1502 = vrot.slane %v1501, 4
      %v1503 = vrot.slane %v875, 5
      %v1504 = vsel %vm682, %v1502, %v1503
      %v1505 = vrot.slane %v1503, 4
      %v1506 = vrot.slane %v931, 5
      %v1507 = vsel %vm682, %v1505, %v1506
      %v1508 = vrot.slane %v1396, 5
      %v1509 = vrot.slane %v1508, 4
      %v1510 = vrot.slane %v877, 5
      %v1511 = vsel %vm682, %v1509, %v1510
      %v1512 = vrot.slane %v1510, 4
      %v1513 = vrot.slane %v932, 5
      %v1514 = vsel %vm682, %v1512, %v1513
      %v1515 = vrot.slane %v1397, 5
      %v1516 = vrot.slane %v1515, 4
      %v1517 = vrot.slane %v879, 5
      %v1518 = vsel %vm682, %v1516, %v1517
      %v1519 = vrot.slane %v1517, 4
      %v1520 = vrot.slane %v933, 5
      %v1521 = vsel %vm682, %v1519, %v1520
      %v1522 = vrot.slane %v1398, 5
      %v1523 = vrot.slane %v1522, 4
      %v1524 = vrot.slane %v881, 5
      %v1525 = vsel %vm682, %v1523, %v1524
      %v1526 = vrot.slane %v1524, 4
      %v1527 = vrot.slane %v934, 5
      %v1528 = vsel %vm682, %v1526, %v1527
      %v1529 = vrot.slane %v1399, 5
      %v1530 = vrot.slane %v1529, 4
      %v1531 = vrot.slane %v883, 5
      %v1532 = vsel %vm682, %v1530, %v1531
      %v1533 = vrot.slane %v1531, 4
      %v1534 = vrot.slane %v935, 5
      %v1535 = vsel %vm682, %v1533, %v1534
      %v1536 = vrot.slane %v1400, 5
      %v1537 = vrot.slane %v1536, 4
      %v1538 = vrot.slane %v885, 5
      %v1539 = vsel %vm682, %v1537, %v1538
      %v1540 = vrot.slane %v1538, 4
      %v1541 = vrot.slane %v936, 5
      %v1542 = vsel %vm682, %v1540, %v1541
      %v1543 = vrot.slane %v1401, 5
      %v1544 = vrot.slane %v1543, 4
      %v1545 = vrot.slane %v887, 5
      %v1546 = vsel %vm682, %v1544, %v1545
      %v1547 = vrot.slane %v1545, 4
      %v1548 = vrot.slane %v937, 5
      %v1549 = vsel %vm682, %v1547, %v1548
      %v1550 = vrot.slane %v1402, 5
      %v1551 = vrot.slane %v1550, 4
      %v1552 = vrot.slane %v889, 5
      %v1553 = vsel %vm682, %v1551, %v1552
      %v1554 = vrot.slane %v1552, 4
      %v1555 = vrot.slane %v938, 5
      %v1556 = vsel %vm682, %v1554, %v1555
      %v1557 = vrot.slane %v1403, 5
      %v1558 = vrot.slane %v1557, 4
      %v1559 = vrot.slane %v891, 5
      %v1560 = vsel %vm682, %v1558, %v1559
      %v1561 = vrot.slane %v1559, 4
      %v1562 = vrot.slane %v939, 5
      %v1563 = vsel %vm682, %v1561, %v1562
      %v1596 = vmax.bf16 %v1356, %v1455
      %v1597 = vmax.bf16 %v1357, %v1458
      %v1598 = vmax.bf16 %v1358, %v1462
      %v1599 = vmax.bf16 %v1359, %v1465
      %v1600 = vmax.bf16 %v1360, %v1469
      %v1601 = vmax.bf16 %v1361, %v1472
      %v1602 = vmax.bf16 %v1362, %v1476
      %v1603 = vmax.bf16 %v1363, %v1479
      %v1604 = vmax.bf16 %v1364, %v1483
      %v1605 = vmax.bf16 %v1365, %v1486
      %v1606 = vmax.bf16 %v1366, %v1490
      %v1607 = vmax.bf16 %v1367, %v1493
      %v1608 = vmax.bf16 %v1368, %v1497
      %v1609 = vmax.bf16 %v1369, %v1500
      %v1610 = vmax.bf16 %v1370, %v1504
      %v1611 = vmax.bf16 %v1371, %v1507
      %v1612 = vmax.bf16 %v1372, %v1511
      %v1613 = vmax.bf16 %v1373, %v1514
      %v1614 = vmax.bf16 %v1374, %v1518
      %v1615 = vmax.bf16 %v1375, %v1521
      %v1616 = vmax.bf16 %v1376, %v1525
      %v1617 = vmax.bf16 %v1377, %v1528
      %v1618 = vmax.bf16 %v1378, %v1532
      %v1619 = vmax.bf16 %v1379, %v1535
      %v1620 = vmax.bf16 %v1380, %v1539
      %v1621 = vmax.bf16 %v1381, %v1542
      %v1622 = vmax.bf16 %v1382, %v1546
      %v1623 = vmax.bf16 %v1383, %v1549
      %v1624 = vmax.bf16 %v1384, %v1553
      %v1625 = vmax.bf16 %v1385, %v1556
      %v1626 = vmax.bf16 %v1386, %v1560
      %v1627 = vmax.bf16 %v1387, %v1563
      %s1628 = scalar_lea.vmem %s111, 24
      %v1629 = vld [vmem:[%s1628] sm:$0xf]
      %v1630 = vld [vmem:[%s1628 + $0x4] sm:$0xf]
      %v1631 = vld [vmem:[%s1628 + $0xc] sm:$0xf]
      %v1632 = vld [vmem:[%s1628 + $0x10] sm:$0xf]
      %v1633 = vld [vmem:[%s1628 + $0x18] sm:$0xf]
      %v1634 = vld [vmem:[%s1628 + $0x1c] sm:$0xf]
      %v1635 = vld [vmem:[%s1628 + $0x24] sm:$0xf]
      %v1636 = vld [vmem:[%s1628 + $0x28] sm:$0xf]
      %v1637 = vld [vmem:[%s1628 + $0x30] sm:$0xf]
      %v1638 = vld [vmem:[%s1628 + $0x34] sm:$0xf]
      %v1639 = vld [vmem:[%s1628 + $0x3c] sm:$0xf]
      %v1640 = vld [vmem:[%s1628 + $0x40] sm:$0xf]
      %v1641 = vld [vmem:[%s1628 + $0x48] sm:$0xf]
      %v1642 = vld [vmem:[%s1628 + $0x4c] sm:$0xf]
      %v1643 = vld [vmem:[%s1628 + $0x54] sm:$0xf]
      %v1644 = vld [vmem:[%s1628 + $0x58] sm:$0xf]
      %v1645 = vld [vmem:[%s1628 + $0x60] sm:$0xf]
      %v1646 = vld [vmem:[%s1628 + $0x64] sm:$0xf]
      %v1647 = vld [vmem:[%s1628 + $0x6c] sm:$0xf]
      %v1648 = vld [vmem:[%s1628 + $0x70] sm:$0xf]
      %v1649 = vld [vmem:[%s1628 + $0x78] sm:$0xf]
      %v1650 = vld [vmem:[%s1628 + $0x7c] sm:$0xf]
      %v1651 = vld [vmem:[%s1628 + $0x84] sm:$0xf]
      %v1652 = vld [vmem:[%s1628 + $0x88] sm:$0xf]
      %v1653 = vld [vmem:[%s1628 + $0x90] sm:$0xf]
      %v1654 = vld [vmem:[%s1628 + $0x94] sm:$0xf]
      %v1655 = vld [vmem:[%s1628 + $0x9c] sm:$0xf]
      %v1656 = vld [vmem:[%s1628 + $0xa0] sm:$0xf]
      %v1657 = vld [vmem:[%s1628 + $0xa8] sm:$0xf]
      %v1658 = vld [vmem:[%s1628 + $0xac] sm:$0xf]
      %v1659 = vld [vmem:[%s1628 + $0xb4] sm:$0xf]
      %v1660 = vld [vmem:[%s1628 + $0xb8] sm:$0xf]
      %v1661 = vmax.bf16 %v1596, %v1629
      %v1662 = vmax.bf16 %v1597, %v1630
      %v1663 = vmax.bf16 %v1598, %v1631
      %v1664 = vmax.bf16 %v1599, %v1632
      %v1665 = vmax.bf16 %v1600, %v1633
      %v1666 = vmax.bf16 %v1601, %v1634
      %v1667 = vmax.bf16 %v1602, %v1635
      %v1668 = vmax.bf16 %v1603, %v1636
      %v1669 = vmax.bf16 %v1604, %v1637
      %v1670 = vmax.bf16 %v1605, %v1638
      %v1671 = vmax.bf16 %v1606, %v1639
      %v1672 = vmax.bf16 %v1607, %v1640
      %v1673 = vmax.bf16 %v1608, %v1641
      %v1674 = vmax.bf16 %v1609, %v1642
      %v1675 = vmax.bf16 %v1610, %v1643
      %v1676 = vmax.bf16 %v1611, %v1644
      %v1677 = vmax.bf16 %v1612, %v1645
      %v1678 = vmax.bf16 %v1613, %v1646
      %v1679 = vmax.bf16 %v1614, %v1647
      %v1680 = vmax.bf16 %v1615, %v1648
      %v1681 = vmax.bf16 %v1616, %v1649
      %v1682 = vmax.bf16 %v1617, %v1650
      %v1683 = vmax.bf16 %v1618, %v1651
      %v1684 = vmax.bf16 %v1619, %v1652
      %v1685 = vmax.bf16 %v1620, %v1653
      %v1686 = vmax.bf16 %v1621, %v1654
      %v1687 = vmax.bf16 %v1622, %v1655
      %v1688 = vmax.bf16 %v1623, %v1656
      %v1689 = vmax.bf16 %v1624, %v1657
      %v1690 = vmax.bf16 %v1625, %v1658
      %v1691 = vmax.bf16 %v1626, %v1659
      %v1692 = vmax.bf16 %v1627, %v1660
      %v1693 = vld [vmem:[%s1628 + $0x8] sm:$0x1]
      %v1694 = vld [vmem:[%s1628 + $0x14] sm:$0x1]
      %v1695 = vld [vmem:[%s1628 + $0x20] sm:$0x1]
      %v1696 = vld [vmem:[%s1628 + $0x2c] sm:$0x1]
      %v1697 = vld [vmem:[%s1628 + $0x38] sm:$0x1]
      %v1698 = vld [vmem:[%s1628 + $0x44] sm:$0x1]
      %v1699 = vld [vmem:[%s1628 + $0x50] sm:$0x1]
      %v1700 = vld [vmem:[%s1628 + $0x5c] sm:$0x1]
      %v1701 = vld [vmem:[%s1628 + $0x68] sm:$0x1]
      %v1702 = vld [vmem:[%s1628 + $0x74] sm:$0x1]
      %v1703 = vld [vmem:[%s1628 + $0x80] sm:$0x1]
      %v1704 = vld [vmem:[%s1628 + $0x8c] sm:$0x1]
      %v1705 = vld [vmem:[%s1628 + $0x98] sm:$0x1]
      %v1706 = vld [vmem:[%s1628 + $0xa4] sm:$0x1]
      %v1707 = vld [vmem:[%s1628 + $0xb0] sm:$0x1]
      %v1708 = vld [vmem:[%s1628 + $0xbc] sm:$0x1]
      %v1710 = vshrl.u32 %v1629, 16
      %v1712 = vrot.slane %v1710, 4
      %v1713 = vshll.u32 %v1629, 16
      %v1715 = vrot.slane %v1713, 5
      %v1716 = vor.u32 %v1712, %v1715
      %v1717 = vrot.slane %v1716, 4
      %v1719 = vshll.u32 %v1630, 16
      %v1721 = vrot.slane %v1719, 5
      %v1722 = vsel %vm167, %v1717, %v1721
      %v1723 = vshrl.u32 %v1630, 16
      %v1725 = vrot.slane %v1723, 4
      %v1726 = vor.u32 %v1725, %v1721
      %v1727 = vrot.slane %v1726, 4
      %v1729 = vshll.u32 %v1693, 16
      %v1731 = vrot.slane %v1729, 5
      %v1732 = vsel %vm167, %v1727, %v1731
      %v1734 = vshrl.u32 %v1631, 16
      %v1736 = vrot.slane %v1734, 4
      %v1737 = vshll.u32 %v1631, 16
      %v1739 = vrot.slane %v1737, 5
      %v1740 = vor.u32 %v1736, %v1739
      %v1741 = vrot.slane %v1740, 4
      %v1743 = vshll.u32 %v1632, 16
      %v1745 = vrot.slane %v1743, 5
      %v1746 = vsel %vm167, %v1741, %v1745
      %v1747 = vshrl.u32 %v1632, 16
      %v1749 = vrot.slane %v1747, 4
      %v1750 = vor.u32 %v1749, %v1745
      %v1751 = vrot.slane %v1750, 4
      %v1753 = vshll.u32 %v1694, 16
      %v1755 = vrot.slane %v1753, 5
      %v1756 = vsel %vm167, %v1751, %v1755
      %v1758 = vshrl.u32 %v1633, 16
      %v1760 = vrot.slane %v1758, 4
      %v1761 = vshll.u32 %v1633, 16
      %v1763 = vrot.slane %v1761, 5
      %v1764 = vor.u32 %v1760, %v1763
      %v1765 = vrot.slane %v1764, 4
      %v1767 = vshll.u32 %v1634, 16
      %v1769 = vrot.slane %v1767, 5
      %v1770 = vsel %vm167, %v1765, %v1769
      %v1771 = vshrl.u32 %v1634, 16
      %v1773 = vrot.slane %v1771, 4
      %v1774 = vor.u32 %v1773, %v1769
      %v1775 = vrot.slane %v1774, 4
      %v1777 = vshll.u32 %v1695, 16
      %v1779 = vrot.slane %v1777, 5
      %v1780 = vsel %vm167, %v1775, %v1779
      %v1782 = vshrl.u32 %v1635, 16
      %v1784 = vrot.slane %v1782, 4
      %v1785 = vshll.u32 %v1635, 16
      %v1787 = vrot.slane %v1785, 5
      %v1788 = vor.u32 %v1784, %v1787
      %v1789 = vrot.slane %v1788, 4
      %v1791 = vshll.u32 %v1636, 16
      %v1793 = vrot.slane %v1791, 5
      %v1794 = vsel %vm167, %v1789, %v1793
      %v1795 = vshrl.u32 %v1636, 16
      %v1797 = vrot.slane %v1795, 4
      %v1798 = vor.u32 %v1797, %v1793
      %v1799 = vrot.slane %v1798, 4
      %v1801 = vshll.u32 %v1696, 16
      %v1803 = vrot.slane %v1801, 5
      %v1804 = vsel %vm167, %v1799, %v1803
      %v1806 = vshrl.u32 %v1637, 16
      %v1808 = vrot.slane %v1806, 4
      %v1809 = vshll.u32 %v1637, 16
      %v1811 = vrot.slane %v1809, 5
      %v1812 = vor.u32 %v1808, %v1811
      %v1813 = vrot.slane %v1812, 4
      %v1815 = vshll.u32 %v1638, 16
      %v1817 = vrot.slane %v1815, 5
      %v1818 = vsel %vm167, %v1813, %v1817
      %v1819 = vshrl.u32 %v1638, 16
      %v1821 = vrot.slane %v1819, 4
      %v1822 = vor.u32 %v1821, %v1817
      %v1823 = vrot.slane %v1822, 4
      %v1825 = vshll.u32 %v1697, 16
      %v1827 = vrot.slane %v1825, 5
      %v1828 = vsel %vm167, %v1823, %v1827
      %v1830 = vshrl.u32 %v1639, 16
      %v1832 = vrot.slane %v1830, 4
      %v1833 = vshll.u32 %v1639, 16
      %v1835 = vrot.slane %v1833, 5
      %v1836 = vor.u32 %v1832, %v1835
      %v1837 = vrot.slane %v1836, 4
      %v1839 = vshll.u32 %v1640, 16
      %v1841 = vrot.slane %v1839, 5
      %v1842 = vsel %vm167, %v1837, %v1841
      %v1843 = vshrl.u32 %v1640, 16
      %v1845 = vrot.slane %v1843, 4
      %v1846 = vor.u32 %v1845, %v1841
      %v1847 = vrot.slane %v1846, 4
      %v1849 = vshll.u32 %v1698, 16
      %v1851 = vrot.slane %v1849, 5
      %v1852 = vsel %vm167, %v1847, %v1851
      %v1854 = vshrl.u32 %v1641, 16
      %v1856 = vrot.slane %v1854, 4
      %v1857 = vshll.u32 %v1641, 16
      %v1859 = vrot.slane %v1857, 5
      %v1860 = vor.u32 %v1856, %v1859
      %v1861 = vrot.slane %v1860, 4
      %v1863 = vshll.u32 %v1642, 16
      %v1865 = vrot.slane %v1863, 5
      %v1866 = vsel %vm167, %v1861, %v1865
      %v1867 = vshrl.u32 %v1642, 16
      %v1869 = vrot.slane %v1867, 4
      %v1870 = vor.u32 %v1869, %v1865
      %v1871 = vrot.slane %v1870, 4
      %v1873 = vshll.u32 %v1699, 16
      %v1875 = vrot.slane %v1873, 5
      %v1876 = vsel %vm167, %v1871, %v1875
      %v1878 = vshrl.u32 %v1643, 16
      %v1880 = vrot.slane %v1878, 4
      %v1881 = vshll.u32 %v1643, 16
      %v1883 = vrot.slane %v1881, 5
      %v1884 = vor.u32 %v1880, %v1883
      %v1885 = vrot.slane %v1884, 4
      %v1887 = vshll.u32 %v1644, 16
      %v1889 = vrot.slane %v1887, 5
      %v1890 = vsel %vm167, %v1885, %v1889
      %v1891 = vshrl.u32 %v1644, 16
      %v1893 = vrot.slane %v1891, 4
      %v1894 = vor.u32 %v1893, %v1889
      %v1895 = vrot.slane %v1894, 4
      %v1897 = vshll.u32 %v1700, 16
      %v1899 = vrot.slane %v1897, 5
      %v1900 = vsel %vm167, %v1895, %v1899
      %v1902 = vshrl.u32 %v1645, 16
      %v1904 = vrot.slane %v1902, 4
      %v1905 = vshll.u32 %v1645, 16
      %v1907 = vrot.slane %v1905, 5
      %v1908 = vor.u32 %v1904, %v1907
      %v1909 = vrot.slane %v1908, 4
      %v1911 = vshll.u32 %v1646, 16
      %v1913 = vrot.slane %v1911, 5
      %v1914 = vsel %vm167, %v1909, %v1913
      %v1915 = vshrl.u32 %v1646, 16
      %v1917 = vrot.slane %v1915, 4
      %v1918 = vor.u32 %v1917, %v1913
      %v1919 = vrot.slane %v1918, 4
      %v1921 = vshll.u32 %v1701, 16
      %v1923 = vrot.slane %v1921, 5
      %v1924 = vsel %vm167, %v1919, %v1923
      %v1926 = vshrl.u32 %v1647, 16
      %v1928 = vrot.slane %v1926, 4
      %v1929 = vshll.u32 %v1647, 16
      %v1931 = vrot.slane %v1929, 5
      %v1932 = vor.u32 %v1928, %v1931
      %v1933 = vrot.slane %v1932, 4
      %v1935 = vshll.u32 %v1648, 16
      %v1937 = vrot.slane %v1935, 5
      %v1938 = vsel %vm167, %v1933, %v1937
      %v1939 = vshrl.u32 %v1648, 16
      %v1941 = vrot.slane %v1939, 4
      %v1942 = vor.u32 %v1941, %v1937
      %v1943 = vrot.slane %v1942, 4
      %v1945 = vshll.u32 %v1702, 16
      %v1947 = vrot.slane %v1945, 5
      %v1948 = vsel %vm167, %v1943, %v1947
      %v1950 = vshrl.u32 %v1649, 16
      %v1952 = vrot.slane %v1950, 4
      %v1953 = vshll.u32 %v1649, 16
      %v1955 = vrot.slane %v1953, 5
      %v1956 = vor.u32 %v1952, %v1955
      %v1957 = vrot.slane %v1956, 4
      %v1959 = vshll.u32 %v1650, 16
      %v1961 = vrot.slane %v1959, 5
      %v1962 = vsel %vm167, %v1957, %v1961
      %v1963 = vshrl.u32 %v1650, 16
      %v1965 = vrot.slane %v1963, 4
      %v1966 = vor.u32 %v1965, %v1961
      %v1967 = vrot.slane %v1966, 4
      %v1969 = vshll.u32 %v1703, 16
      %v1971 = vrot.slane %v1969, 5
      %v1972 = vsel %vm167, %v1967, %v1971
      %v1974 = vshrl.u32 %v1651, 16
      %v1976 = vrot.slane %v1974, 4
      %v1977 = vshll.u32 %v1651, 16
      %v1979 = vrot.slane %v1977, 5
      %v1980 = vor.u32 %v1976, %v1979
      %v1981 = vrot.slane %v1980, 4
      %v1983 = vshll.u32 %v1652, 16
      %v1985 = vrot.slane %v1983, 5
      %v1986 = vsel %vm167, %v1981, %v1985
      %v1987 = vshrl.u32 %v1652, 16
      %v1989 = vrot.slane %v1987, 4
      %v1990 = vor.u32 %v1989, %v1985
      %v1991 = vrot.slane %v1990, 4
      %v1993 = vshll.u32 %v1704, 16
      %v1995 = vrot.slane %v1993, 5
      %v1996 = vsel %vm167, %v1991, %v1995
      %v1998 = vshrl.u32 %v1653, 16
      %v2000 = vrot.slane %v1998, 4
      %v2001 = vshll.u32 %v1653, 16
      %v2003 = vrot.slane %v2001, 5
      %v2004 = vor.u32 %v2000, %v2003
      %v2005 = vrot.slane %v2004, 4
      %v2007 = vshll.u32 %v1654, 16
      %v2009 = vrot.slane %v2007, 5
      %v2010 = vsel %vm167, %v2005, %v2009
      %v2011 = vshrl.u32 %v1654, 16
      %v2013 = vrot.slane %v2011, 4
      %v2014 = vor.u32 %v2013, %v2009
      %v2015 = vrot.slane %v2014, 4
      %v2017 = vshll.u32 %v1705, 16
      %v2019 = vrot.slane %v2017, 5
      %v2020 = vsel %vm167, %v2015, %v2019
      %v2022 = vshrl.u32 %v1655, 16
      %v2024 = vrot.slane %v2022, 4
      %v2025 = vshll.u32 %v1655, 16
      %v2027 = vrot.slane %v2025, 5
      %v2028 = vor.u32 %v2024, %v2027
      %v2029 = vrot.slane %v2028, 4
      %v2031 = vshll.u32 %v1656, 16
      %v2033 = vrot.slane %v2031, 5
      %v2034 = vsel %vm167, %v2029, %v2033
      %v2035 = vshrl.u32 %v1656, 16
      %v2037 = vrot.slane %v2035, 4
      %v2038 = vor.u32 %v2037, %v2033
      %v2039 = vrot.slane %v2038, 4
      %v2041 = vshll.u32 %v1706, 16
      %v2043 = vrot.slane %v2041, 5
      %v2044 = vsel %vm167, %v2039, %v2043
      %v2046 = vshrl.u32 %v1657, 16
      %v2048 = vrot.slane %v2046, 4
      %v2049 = vshll.u32 %v1657, 16
      %v2051 = vrot.slane %v2049, 5
      %v2052 = vor.u32 %v2048, %v2051
      %v2053 = vrot.slane %v2052, 4
      %v2055 = vshll.u32 %v1658, 16
      %v2057 = vrot.slane %v2055, 5
      %v2058 = vsel %vm167, %v2053, %v2057
      %v2059 = vshrl.u32 %v1658, 16
      %v2061 = vrot.slane %v2059, 4
      %v2062 = vor.u32 %v2061, %v2057
      %v2063 = vrot.slane %v2062, 4
      %v2065 = vshll.u32 %v1707, 16
      %v2067 = vrot.slane %v2065, 5
      %v2068 = vsel %vm167, %v2063, %v2067
      %v2070 = vshrl.u32 %v1659, 16
      %v2072 = vrot.slane %v2070, 4
      %v2073 = vshll.u32 %v1659, 16
      %v2075 = vrot.slane %v2073, 5
      %v2076 = vor.u32 %v2072, %v2075
      %v2077 = vrot.slane %v2076, 4
      %v2079 = vshll.u32 %v1660, 16
      %v2081 = vrot.slane %v2079, 5
      %v2082 = vsel %vm167, %v2077, %v2081
      %v2083 = vshrl.u32 %v1660, 16
      %v2085 = vrot.slane %v2083, 4
      %v2086 = vor.u32 %v2085, %v2081
      %v2087 = vrot.slane %v2086, 4
      %v2089 = vshll.u32 %v1708, 16
      %v2091 = vrot.slane %v2089, 5
      %v2092 = vsel %vm167, %v2087, %v2091
      %v2125 = vmax.bf16 %v1661, %v1722
      %v2126 = vmax.bf16 %v1662, %v1732
      %v2127 = vmax.bf16 %v1663, %v1746
      %v2128 = vmax.bf16 %v1664, %v1756
      %v2129 = vmax.bf16 %v1665, %v1770
      %v2130 = vmax.bf16 %v1666, %v1780
      %v2131 = vmax.bf16 %v1667, %v1794
      %v2132 = vmax.bf16 %v1668, %v1804
      %v2133 = vmax.bf16 %v1669, %v1818
      %v2134 = vmax.bf16 %v1670, %v1828
      %v2135 = vmax.bf16 %v1671, %v1842
      %v2136 = vmax.bf16 %v1672, %v1852
      %v2137 = vmax.bf16 %v1673, %v1866
      %v2138 = vmax.bf16 %v1674, %v1876
      %v2139 = vmax.bf16 %v1675, %v1890
      %v2140 = vmax.bf16 %v1676, %v1900
      %v2141 = vmax.bf16 %v1677, %v1914
      %v2142 = vmax.bf16 %v1678, %v1924
      %v2143 = vmax.bf16 %v1679, %v1938
      %v2144 = vmax.bf16 %v1680, %v1948
      %v2145 = vmax.bf16 %v1681, %v1962
      %v2146 = vmax.bf16 %v1682, %v1972
      %v2147 = vmax.bf16 %v1683, %v1986
      %v2148 = vmax.bf16 %v1684, %v1996
      %v2149 = vmax.bf16 %v1685, %v2010
      %v2150 = vmax.bf16 %v1686, %v2020
      %v2151 = vmax.bf16 %v1687, %v2034
      %v2152 = vmax.bf16 %v1688, %v2044
      %v2153 = vmax.bf16 %v1689, %v2058
      %v2154 = vmax.bf16 %v1690, %v2068
      %v2155 = vmax.bf16 %v1691, %v2082
      %v2156 = vmax.bf16 %v1692, %v2092
      %v2157 = vld [vmem:[%s1628] sm:$0xe]
      %v2158 = vld [vmem:[%s1628 + $0xc] sm:$0xe]
      %v2159 = vld [vmem:[%s1628 + $0x18] sm:$0xe]
      %v2160 = vld [vmem:[%s1628 + $0x24] sm:$0xe]
      %v2161 = vld [vmem:[%s1628 + $0x30] sm:$0xe]
      %v2162 = vld [vmem:[%s1628 + $0x3c] sm:$0xe]
      %v2163 = vld [vmem:[%s1628 + $0x48] sm:$0xe]
      %v2164 = vld [vmem:[%s1628 + $0x54] sm:$0xe]
      %v2165 = vld [vmem:[%s1628 + $0x60] sm:$0xe]
      %v2166 = vld [vmem:[%s1628 + $0x6c] sm:$0xe]
      %v2167 = vld [vmem:[%s1628 + $0x78] sm:$0xe]
      %v2168 = vld [vmem:[%s1628 + $0x84] sm:$0xe]
      %v2169 = vld [vmem:[%s1628 + $0x90] sm:$0xe]
      %v2170 = vld [vmem:[%s1628 + $0x9c] sm:$0xe]
      %v2171 = vld [vmem:[%s1628 + $0xa8] sm:$0xe]
      %v2172 = vld [vmem:[%s1628 + $0xb4] sm:$0xe]
      %v2221 = vrot.slane %v2157, 5
      %v2222 = vrot.slane %v2221, 4
      %v2223 = vrot.slane %v1630, 5
      %v2224 = vsel %vm682, %v2222, %v2223
      %v2225 = vrot.slane %v2223, 4
      %v2226 = vrot.slane %v1693, 5
      %v2227 = vsel %vm682, %v2225, %v2226
      %v2228 = vrot.slane %v2158, 5
      %v2229 = vrot.slane %v2228, 4
      %v2230 = vrot.slane %v1632, 5
      %v2231 = vsel %vm682, %v2229, %v2230
      %v2232 = vrot.slane %v2230, 4
      %v2233 = vrot.slane %v1694, 5
      %v2234 = vsel %vm682, %v2232, %v2233
      %v2235 = vrot.slane %v2159, 5
      %v2236 = vrot.slane %v2235, 4
      %v2237 = vrot.slane %v1634, 5
      %v2238 = vsel %vm682, %v2236, %v2237
      %v2239 = vrot.slane %v2237, 4
      %v2240 = vrot.slane %v1695, 5
      %v2241 = vsel %vm682, %v2239, %v2240
      %v2242 = vrot.slane %v2160, 5
      %v2243 = vrot.slane %v2242, 4
      %v2244 = vrot.slane %v1636, 5
      %v2245 = vsel %vm682, %v2243, %v2244
      %v2246 = vrot.slane %v2244, 4
      %v2247 = vrot.slane %v1696, 5
      %v2248 = vsel %vm682, %v2246, %v2247
      %v2249 = vrot.slane %v2161, 5
      %v2250 = vrot.slane %v2249, 4
      %v2251 = vrot.slane %v1638, 5
      %v2252 = vsel %vm682, %v2250, %v2251
      %v2253 = vrot.slane %v2251, 4
      %v2254 = vrot.slane %v1697, 5
      %v2255 = vsel %vm682, %v2253, %v2254
      %v2256 = vrot.slane %v2162, 5
      %v2257 = vrot.slane %v2256, 4
      %v2258 = vrot.slane %v1640, 5
      %v2259 = vsel %vm682, %v2257, %v2258
      %v2260 = vrot.slane %v2258, 4
      %v2261 = vrot.slane %v1698, 5
      %v2262 = vsel %vm682, %v2260, %v2261
      %v2263 = vrot.slane %v2163, 5
      %v2264 = vrot.slane %v2263, 4
      %v2265 = vrot.slane %v1642, 5
      %v2266 = vsel %vm682, %v2264, %v2265
      %v2267 = vrot.slane %v2265, 4
      %v2268 = vrot.slane %v1699, 5
      %v2269 = vsel %vm682, %v2267, %v2268
      %v2270 = vrot.slane %v2164, 5
      %v2271 = vrot.slane %v2270, 4
      %v2272 = vrot.slane %v1644, 5
      %v2273 = vsel %vm682, %v2271, %v2272
      %v2274 = vrot.slane %v2272, 4
      %v2275 = vrot.slane %v1700, 5
      %v2276 = vsel %vm682, %v2274, %v2275
      %v2277 = vrot.slane %v2165, 5
      %v2278 = vrot.slane %v2277, 4
      %v2279 = vrot.slane %v1646, 5
      %v2280 = vsel %vm682, %v2278, %v2279
      %v2281 = vrot.slane %v2279, 4
      %v2282 = vrot.slane %v1701, 5
      %v2283 = vsel %vm682, %v2281, %v2282
      %v2284 = vrot.slane %v2166, 5
      %v2285 = vrot.slane %v2284, 4
      %v2286 = vrot.slane %v1648, 5
      %v2287 = vsel %vm682, %v2285, %v2286
      %v2288 = vrot.slane %v2286, 4
      %v2289 = vrot.slane %v1702, 5
      %v2290 = vsel %vm682, %v2288, %v2289
      %v2291 = vrot.slane %v2167, 5
      %v2292 = vrot.slane %v2291, 4
      %v2293 = vrot.slane %v1650, 5
      %v2294 = vsel %vm682, %v2292, %v2293
      %v2295 = vrot.slane %v2293, 4
      %v2296 = vrot.slane %v1703, 5
      %v2297 = vsel %vm682, %v2295, %v2296
      %v2298 = vrot.slane %v2168, 5
      %v2299 = vrot.slane %v2298, 4
      %v2300 = vrot.slane %v1652, 5
      %v2301 = vsel %vm682, %v2299, %v2300
      %v2302 = vrot.slane %v2300, 4
      %v2303 = vrot.slane %v1704, 5
      %v2304 = vsel %vm682, %v2302, %v2303
      %v2305 = vrot.slane %v2169, 5
      %v2306 = vrot.slane %v2305, 4
      %v2307 = vrot.slane %v1654, 5
      %v2308 = vsel %vm682, %v2306, %v2307
      %v2309 = vrot.slane %v2307, 4
      %v2310 = vrot.slane %v1705, 5
      %v2311 = vsel %vm682, %v2309, %v2310
      %v2312 = vrot.slane %v2170, 5
      %v2313 = vrot.slane %v2312, 4
      %v2314 = vrot.slane %v1656, 5
      %v2315 = vsel %vm682, %v2313, %v2314
      %v2316 = vrot.slane %v2314, 4
      %v2317 = vrot.slane %v1706, 5
      %v2318 = vsel %vm682, %v2316, %v2317
      %v2319 = vrot.slane %v2171, 5
      %v2320 = vrot.slane %v2319, 4
      %v2321 = vrot.slane %v1658, 5
      %v2322 = vsel %vm682, %v2320, %v2321
      %v2323 = vrot.slane %v2321, 4
      %v2324 = vrot.slane %v1707, 5
      %v2325 = vsel %vm682, %v2323, %v2324
      %v2326 = vrot.slane %v2172, 5
      %v2327 = vrot.slane %v2326, 4
      %v2328 = vrot.slane %v1660, 5
      %v2329 = vsel %vm682, %v2327, %v2328
      %v2330 = vrot.slane %v2328, 4
      %v2331 = vrot.slane %v1708, 5
      %v2332 = vsel %vm682, %v2330, %v2331
      %v2365 = vmax.bf16 %v2125, %v2224
      %v2366 = vmax.bf16 %v2126, %v2227
      %v2367 = vmax.bf16 %v2127, %v2231
      %v2368 = vmax.bf16 %v2128, %v2234
      %v2369 = vmax.bf16 %v2129, %v2238
      %v2370 = vmax.bf16 %v2130, %v2241
      %v2371 = vmax.bf16 %v2131, %v2245
      %v2372 = vmax.bf16 %v2132, %v2248
      %v2373 = vmax.bf16 %v2133, %v2252
      %v2374 = vmax.bf16 %v2134, %v2255
      %v2375 = vmax.bf16 %v2135, %v2259
      %v2376 = vmax.bf16 %v2136, %v2262
      %v2377 = vmax.bf16 %v2137, %v2266
      %v2378 = vmax.bf16 %v2138, %v2269
      %v2379 = vmax.bf16 %v2139, %v2273
      %v2380 = vmax.bf16 %v2140, %v2276
      %v2381 = vmax.bf16 %v2141, %v2280
      %v2382 = vmax.bf16 %v2142, %v2283
      %v2383 = vmax.bf16 %v2143, %v2287
      %v2384 = vmax.bf16 %v2144, %v2290
      %v2385 = vmax.bf16 %v2145, %v2294
      %v2386 = vmax.bf16 %v2146, %v2297
      %v2387 = vmax.bf16 %v2147, %v2301
      %v2388 = vmax.bf16 %v2148, %v2304
      %v2389 = vmax.bf16 %v2149, %v2308
      %v2390 = vmax.bf16 %v2150, %v2311
      %v2391 = vmax.bf16 %v2151, %v2315
      %v2392 = vmax.bf16 %v2152, %v2318
      %v2393 = vmax.bf16 %v2153, %v2322
      %v2394 = vmax.bf16 %v2154, %v2325
      %v2395 = vmax.bf16 %v2155, %v2329
      %v2396 = vmax.bf16 %v2156, %v2332
      %vm2397 = vcmask 519168
      %2398 = vst.msk [vmem:[%s116] sm:$0xf] %vm2397, %v2365
      %2399 = vst.msk [vmem:[%s116 + $0x4] sm:$0xf] %vm2397, %v2366
      %2400 = vst.msk [vmem:[%s116 + $0x8] sm:$0xf] %vm2397, %v2367
      %2401 = vst.msk [vmem:[%s116 + $0xc] sm:$0xf] %vm2397, %v2368
      %2402 = vst.msk [vmem:[%s116 + $0x10] sm:$0xf] %vm2397, %v2369
      %2403 = vst.msk [vmem:[%s116 + $0x14] sm:$0xf] %vm2397, %v2370
      %2404 = vst.msk [vmem:[%s116 + $0x18] sm:$0xf] %vm2397, %v2371
      %2405 = vst.msk [vmem:[%s116 + $0x1c] sm:$0xf] %vm2397, %v2372
      %2406 = vst.msk [vmem:[%s116 + $0x20] sm:$0xf] %vm2397, %v2373
      %2407 = vst.msk [vmem:[%s116 + $0x24] sm:$0xf] %vm2397, %v2374
      %2408 = vst.msk [vmem:[%s116 + $0x28] sm:$0xf] %vm2397, %v2375
      %2409 = vst.msk [vmem:[%s116 + $0x2c] sm:$0xf] %vm2397, %v2376
      %2410 = vst.msk [vmem:[%s116 + $0x30] sm:$0xf] %vm2397, %v2377
      %2411 = vst.msk [vmem:[%s116 + $0x34] sm:$0xf] %vm2397, %v2378
      %2412 = vst.msk [vmem:[%s116 + $0x38] sm:$0xf] %vm2397, %v2379
      %2413 = vst.msk [vmem:[%s116 + $0x3c] sm:$0xf] %vm2397, %v2380
      %2414 = vst.msk [vmem:[%s116 + $0x40] sm:$0xf] %vm2397, %v2381
      %2415 = vst.msk [vmem:[%s116 + $0x44] sm:$0xf] %vm2397, %v2382
      %2416 = vst.msk [vmem:[%s116 + $0x48] sm:$0xf] %vm2397, %v2383
      %2417 = vst.msk [vmem:[%s116 + $0x4c] sm:$0xf] %vm2397, %v2384
      %2418 = vst.msk [vmem:[%s116 + $0x50] sm:$0xf] %vm2397, %v2385
      %2419 = vst.msk [vmem:[%s116 + $0x54] sm:$0xf] %vm2397, %v2386
      %2420 = vst.msk [vmem:[%s116 + $0x58] sm:$0xf] %vm2397, %v2387
      %2421 = vst.msk [vmem:[%s116 + $0x5c] sm:$0xf] %vm2397, %v2388
      %2422 = vst.msk [vmem:[%s116 + $0x60] sm:$0xf] %vm2397, %v2389
      %2423 = vst.msk [vmem:[%s116 + $0x64] sm:$0xf] %vm2397, %v2390
      %2424 = vst.msk [vmem:[%s116 + $0x68] sm:$0xf] %vm2397, %v2391
      %2425 = vst.msk [vmem:[%s116 + $0x6c] sm:$0xf] %vm2397, %v2392
      %2426 = vst.msk [vmem:[%s116 + $0x70] sm:$0xf] %vm2397, %v2393
      %2427 = vst.msk [vmem:[%s116 + $0x74] sm:$0xf] %vm2397, %v2394
      %2428 = vst.msk [vmem:[%s116 + $0x78] sm:$0xf] %vm2397, %v2395
      %2429 = vst.msk [vmem:[%s116 + $0x7c] sm:$0xf] %vm2397, %v2396
      %p2430 = scmp.lt.s32.totalorder %s12, 1
      %s2431 = scalar_select %p2430, %s12, 1
      %s2432 = smul.addr %s2431, 32
      %s2433 = smul.addr %s2432, 4
      %s2434 = scalar_lea.vmem %s1, %s2433
      // Predicated region
      $region25: #{_stem.3} parent=23 // pred_check
        %p2435 = pneg %p56
      $region26: #{_stem.3} parent=23 // pred_check_branch
        %2437 = sbr.rel (%p2435) target = $region28
      $region27: #{_stem.3} parent=23 // pred_region
        _
      $region28: #{_stem.3} parent=23 // pred_fallthru
        _
    $region24: #{_stem.3} parent=5 // pred_fallthru
      _
    %p2438 = scmp.le.s32.totalorder 2, %s7
    // Predicated region
    $region29: #{_stem.3} parent=5 // pred_check
      %p2439 = pneg %p2438
    $region30: #{_stem.3} parent=5 // pred_check_branch
      %2441 = sbr.rel (%p2439) target = $region32
    $region31: #{_stem.3} parent=5 // pred_region
      %s2442 = ssub.s32 %s7, 2
      // Predicated region
      $region33: #{_stem.3} parent=31 // pred_check
        %p2443 = pneg %p62
      $region34: #{_stem.3} parent=31 // pred_check_branch
        %2445 = sbr.rel (%p2443) target = $region36
      $region35: #{_stem.3} parent=31 // pred_region
        %p2446 = scmp.lt.s32.totalorder %s13, 1
        %s2447 = scalar_select %p2446, %s13, 1
        %s2448 = smul.addr %s2447, 32
        %s2449 = smul.addr %s2448, 4
        %s2450 = scalar_lea.vmem %s1, %s2449
      $region36: #{_stem.3} parent=31 // pred_fallthru
        _
    $region32: #{_stem.3} parent=5 // pred_fallthru
      _
  $region6: #{_stem.3} parent=0 // loop_footer
    %s11 = sadd.s32 1, %s7
  $region7: #{_stem.3} parent=0 // loop_footer_branch
    %6 = sbr.rel target = $region3
  $region8: #{_stem.3} parent=0 // loop_exit
    _

</llo_original>
